<compile_context>
chip_gen: v7x
topology: tpu7x:2x2x1
jax: 0.10.0
libtpu: 0.0.40
codegen_flags: <defaults>
</compile_context>

<pallas_src>
import jax
import jax.numpy as jnp
from jax import lax
from jax.experimental import pallas as pl
from jax.experimental.pallas import tpu as pltpu

# Layer sizes of Model1
DIMS = [1, 12, 12, 10, 10, 9, 1]
N_LAYERS = len(DIMS) - 1            # 6
P = 16                              # padded feature dim (>= max(DIMS))
CHUNK = 512                         # lanes per register-resident chunk (4 x 128)


def _round_up(n, m):
    return (n + m - 1) // m * m


def mlp_kernel(x_ref, w_ref, b_ref, o_ref):
    """Fused 6-layer MLP forward for one block of batch rows.

    x_ref / o_ref : (rows, CHUNK)  -- each row is 512 independent batch points
                                      laid out on the lane axis.
    w_ref         : (6, P, P)      -- zero-padded weight slab (layer 6 stored as a column).
    b_ref         : (6, P, 1)      -- zero-padded bias slab.

    Each row is processed with register-resident (P, CHUNK) activations:
      layer 1 (fan-in 1)  : VPU broadcast multiply-add (no MXU)
      layers 2..5         : (P,P) @ (P,CHUNK) MXU matmuls, f32 accumulate
      layer 6 (fan-out 1) : weighted sublane reduction (XLU)
    Zero-padded weight rows/cols and biases keep padded feature rows exactly 0
    through every ReLU, so the padding never contaminates the result.
    """
    nrows = x_ref.shape[0]

    # Hoist the tiny weights/biases out of the row loop (loop-invariant).
    w1 = w_ref[0, :, 0:1]                                   # (P, 1)
    b1 = b_ref[0]                                           # (P, 1)
    w_mid = [w_ref[l] for l in range(1, N_LAYERS - 1)]      # 4 x (P, P), (out, in)
    b_mid = [b_ref[l] for l in range(1, N_LAYERS - 1)]      # 4 x (P, 1)
    w6 = w_ref[N_LAYERS - 1, :, 0:1]                        # (P, 1), column layout
    b6 = b_ref[N_LAYERS - 1, 0:1, :]                        # (1, 1)

    def row_body(r, carry):
        xr = x_ref[pl.ds(r, 1), :]                          # (1, CHUNK)
        # ---- layer 1 (fan-in 1): broadcast FMA on the VPU ----
        h = jnp.maximum(w1 * xr + b1, 0.0)                  # (P, CHUNK)
        # ---- layers 2..5: small MXU matmuls, result lane extent = CHUNK ----
        for w, b in zip(w_mid, b_mid):
            h = jnp.maximum(
                jnp.dot(w, h, preferred_element_type=jnp.float32) + b, 0.0)
        # ---- layer 6 (fan-out 1): weighted sublane reduction ----
        out = jnp.sum(w6 * h, axis=0, keepdims=True) + b6   # (1, CHUNK)
        o_ref[pl.ds(r, 1), :] = out.astype(o_ref.dtype)
        return carry

    # unroll=2 keeps two independent 512-lane chunks in flight (hides MXU
    # result latency) while staying well inside the 64-vreg file.
    lax.fori_loop(0, nrows, row_body, 0, unroll=2)


def model1_forward(x, w_slab, b_slab, *, tm_max=16384):
    """x: (N, 1) float32 (any N).  w_slab: (6, P, P), b_slab: (6, P, 1)."""
    N = int(x.shape[0])

    n_unit = _round_up(max(N, 1), CHUNK)
    n_rows = n_unit // CHUNK

    # Rows of 512 lanes per grid step.  Multiple-of-8 row blocks keep the
    # streamed buffers (8,128)-tileable; small batches (the N~1000 serving
    # case) take a single grid step so there is no per-step pipeline overhead.
    rows_max = max(8, (max(tm_max, CHUNK) // CHUNK) // 8 * 8)
    rows_per_step = n_rows if n_rows <= rows_max else rows_max
    grid = pl.cdiv(n_rows, rows_per_step)
    # NOTE(v7x): for very large N an even grid count balances the two
    # TensorCores; the "parallel" semantic below lets the runtime shard it.
    # Streamed buffers are < 1 MiB total, far below scoped VMEM on all gens.

    # (N,1) -> flat is metadata-only; only the final partial 512-chunk is padded.
    x_flat = jnp.ravel(x).astype(jnp.float32)
    if n_unit != N:
        x_flat = jnp.pad(x_flat, (0, n_unit - N))
    x2d = x_flat.reshape(n_rows, CHUNK)

    out2d = pl.pallas_call(
        mlp_kernel,
        out_shape=jax.ShapeDtypeStruct((n_rows, CHUNK), jnp.float32),
        grid_spec=pltpu.PrefetchScalarGridSpec(
            num_scalar_prefetch=0,
            grid=(grid,),
            in_specs=[
                # Streamed batch rows (dense (8,128)-tiled blocks).
                pl.BlockSpec((rows_per_step, CHUNK), lambda i: (i, 0)),
                # Grid-invariant weight/bias slabs: constant index_map, so the
                # copy only happens for the first grid step.
                pl.BlockSpec((N_LAYERS, P, P), lambda i: (0, 0, 0)),
                pl.BlockSpec((N_LAYERS, P, 1), lambda i: (0, 0, 0)),
            ],
            out_specs=pl.BlockSpec((rows_per_step, CHUNK), lambda i: (i, 0)),
        ),
        compiler_params=pltpu.CompilerParams(
            dimension_semantics=("parallel",)),
    )(x2d, w_slab, b_slab)

    # Free reshape; the [:N] slice only copies when N was padded to CHUNK.
    return out2d.reshape(-1)[:N].reshape(N, 1)


def init_params(key):
    """nn.Linear-style init: W is (out, in), b is (out,), uniform(+-1/sqrt(fan_in))."""
    params = []
    for d_in, d_out in zip(DIMS[:-1], DIMS[1:]):
        key, kw, kb = jax.random.split(key, 3)
        bound = float(d_in) ** -0.5
        w = jax.random.uniform(kw, (d_out, d_in), jnp.float32, -bound, bound)
        b = jax.random.uniform(kb, (d_out,), jnp.float32, -bound, bound)
        params.append((w, b))
    return params


def pack_params(params):
    """Pack 6 (W, b) pairs into one (6,P,P) weight slab and one (6,P,1) bias slab.

    Layers 1..5 are stored in PyTorch (out, in) layout (kernel does W @ h).
    Layer 6 is stored as a COLUMN (in, 1) so the kernel can do a weighted
    sublane reduction instead of a degenerate MXU matmul.  Zero padding keeps
    padded activation rows exactly zero.
    """
    w_slab = jnp.zeros((N_LAYERS, P, P), jnp.float32)
    b_slab = jnp.zeros((N_LAYERS, P, 1), jnp.float32)
    for l, (w, b) in enumerate(params):
        d_out, d_in = w.shape
        if l == N_LAYERS - 1:
            w_slab = w_slab.at[l, :d_in, 0].set(w[0, :])
        else:
            w_slab = w_slab.at[l, :d_out, :d_in].set(w)
        b_slab = b_slab.at[l, :d_out, 0].set(b)
    return w_slab, b_slab


def reference_forward(x, params):
    """Plain-JAX reference in the original (N, F) layout (matches PyTorch)."""
    h = x
    for i, (w, b) in enumerate(params):
        h = h @ w.T + b
        if i < len(params) - 1:
            h = jnp.maximum(h, 0.0)
    return h


if __name__ == "__main__":
    key = jax.random.PRNGKey(0)
    key, kx1, kx2 = jax.random.split(key, 3)

    params = init_params(key)
    w_slab, b_slab = pack_params(params)

    # Case 1: the module's own workload size (1000 points in [-1, 1]) --
    # single grid step, two register-resident 512-lane chunks, partial tail.
    x1 = jax.random.uniform(kx1, (1000, 1), jnp.float32, -1.0, 1.0)
    out1 = jax.block_until_ready(model1_forward(x1, w_slab, b_slab))
    ref1 = reference_forward(x1, params)
    assert out1.shape == (1000, 1)
    assert jnp.allclose(out1, ref1, atol=1e-5, rtol=1e-5), float(
        jnp.max(jnp.abs(out1 - ref1)))

    # Case 2: multi-step pipelined path (2 grid steps x 8 rows x 512 lanes).
    x2 = jax.random.uniform(kx2, (8192, 1), jnp.float32, -1.0, 1.0)
    out2 = jax.block_until_ready(model1_forward(x2, w_slab, b_slab, tm_max=4096))
    ref2 = reference_forward(x2, params)
    assert out2.shape == (8192, 1)
    assert jnp.allclose(out2, ref2, atol=1e-5, rtol=1e-5), float(
        jnp.max(jnp.abs(out2 - ref2)))

    print("KERNEL_OK")
</pallas_src>

<mosaic_0001>
module attributes {stable_mosaic.version = 11 : i64} {
  func.func @mlp_kernel(%arg0: i32, %arg1: memref<2x512xf32, #tpu.memory_space<vmem>>, %arg2: memref<6x16x16xf32, #tpu.memory_space<vmem>>, %arg3: memref<6x16x1xf32, #tpu.memory_space<vmem>>, %arg4: memref<2x512xf32, #tpu.memory_space<vmem>>) attributes {dimension_semantics = [#tpu.dimension_semantics<parallel>], iteration_bounds = array<i64: 1>, scalar_prefetch = 0 : i64, scratch_operands = 0 : i64, tpu.core_type = #tpu.core_type<tc>, window_params = [{transform_indices = @transform_0, window_bounds = array<i64: 2, 512>}, {pipeline_mode = #tpu.pipeline_mode<synchronous>, transform_indices = @transform_1, window_bounds = array<i64: 6, 16, 16>}, {pipeline_mode = #tpu.pipeline_mode<synchronous>, transform_indices = @transform_2, window_bounds = array<i64: 6, 16, 1>}, {transform_indices = @transform_3, window_bounds = array<i64: 2, 512>}]} {
    %c0 = arith.constant 0 : index
    %c0_0 = arith.constant 0 : index
    %c0_1 = arith.constant 0 : index
    %0 = vector.load %arg2[%c0, %c0_0, %c0_1] : memref<6x16x16xf32, #tpu.memory_space<vmem>>, vector<1x16x1xf32>
    %1 = vector.shape_cast %0 : vector<1x16x1xf32> to vector<16x1xf32>
    %c0_2 = arith.constant 0 : index
    %c0_3 = arith.constant 0 : index
    %c0_4 = arith.constant 0 : index
    %2 = vector.load %arg3[%c0_2, %c0_3, %c0_4] : memref<6x16x1xf32, #tpu.memory_space<vmem>>, vector<1x16x1xf32>
    %3 = vector.shape_cast %2 : vector<1x16x1xf32> to vector<16x1xf32>
    %c1 = arith.constant 1 : index
    %c0_5 = arith.constant 0 : index
    %c0_6 = arith.constant 0 : index
    %4 = vector.load %arg2[%c1, %c0_5, %c0_6] : memref<6x16x16xf32, #tpu.memory_space<vmem>>, vector<1x16x16xf32>
    %5 = vector.shape_cast %4 : vector<1x16x16xf32> to vector<16x16xf32>
    %c2 = arith.constant 2 : index
    %c0_7 = arith.constant 0 : index
    %c0_8 = arith.constant 0 : index
    %6 = vector.load %arg2[%c2, %c0_7, %c0_8] : memref<6x16x16xf32, #tpu.memory_space<vmem>>, vector<1x16x16xf32>
    %7 = vector.shape_cast %6 : vector<1x16x16xf32> to vector<16x16xf32>
    %c3 = arith.constant 3 : index
    %c0_9 = arith.constant 0 : index
    %c0_10 = arith.constant 0 : index
    %8 = vector.load %arg2[%c3, %c0_9, %c0_10] : memref<6x16x16xf32, #tpu.memory_space<vmem>>, vector<1x16x16xf32>
    %9 = vector.shape_cast %8 : vector<1x16x16xf32> to vector<16x16xf32>
    %c4 = arith.constant 4 : index
    %c0_11 = arith.constant 0 : index
    %c0_12 = arith.constant 0 : index
    %10 = vector.load %arg2[%c4, %c0_11, %c0_12] : memref<6x16x16xf32, #tpu.memory_space<vmem>>, vector<1x16x16xf32>
    %11 = vector.shape_cast %10 : vector<1x16x16xf32> to vector<16x16xf32>
    %c1_13 = arith.constant 1 : index
    %c0_14 = arith.constant 0 : index
    %c0_15 = arith.constant 0 : index
    %12 = vector.load %arg3[%c1_13, %c0_14, %c0_15] : memref<6x16x1xf32, #tpu.memory_space<vmem>>, vector<1x16x1xf32>
    %13 = vector.shape_cast %12 : vector<1x16x1xf32> to vector<16x1xf32>
    %c2_16 = arith.constant 2 : index
    %c0_17 = arith.constant 0 : index
    %c0_18 = arith.constant 0 : index
    %14 = vector.load %arg3[%c2_16, %c0_17, %c0_18] : memref<6x16x1xf32, #tpu.memory_space<vmem>>, vector<1x16x1xf32>
    %15 = vector.shape_cast %14 : vector<1x16x1xf32> to vector<16x1xf32>
    %c3_19 = arith.constant 3 : index
    %c0_20 = arith.constant 0 : index
    %c0_21 = arith.constant 0 : index
    %16 = vector.load %arg3[%c3_19, %c0_20, %c0_21] : memref<6x16x1xf32, #tpu.memory_space<vmem>>, vector<1x16x1xf32>
    %17 = vector.shape_cast %16 : vector<1x16x1xf32> to vector<16x1xf32>
    %c4_22 = arith.constant 4 : index
    %c0_23 = arith.constant 0 : index
    %c0_24 = arith.constant 0 : index
    %18 = vector.load %arg3[%c4_22, %c0_23, %c0_24] : memref<6x16x1xf32, #tpu.memory_space<vmem>>, vector<1x16x1xf32>
    %19 = vector.shape_cast %18 : vector<1x16x1xf32> to vector<16x1xf32>
    %c5 = arith.constant 5 : index
    %c0_25 = arith.constant 0 : index
    %c0_26 = arith.constant 0 : index
    %20 = vector.load %arg2[%c5, %c0_25, %c0_26] : memref<6x16x16xf32, #tpu.memory_space<vmem>>, vector<1x16x1xf32>
    %21 = vector.shape_cast %20 : vector<1x16x1xf32> to vector<16x1xf32>
    %c5_27 = arith.constant 5 : index
    %c0_28 = arith.constant 0 : index
    %c0_29 = arith.constant 0 : index
    %22 = vector.load %arg3[%c5_27, %c0_28, %c0_29] : memref<6x16x1xf32, #tpu.memory_space<vmem>>, vector<1x1x1xf32>
    %23 = vector.shape_cast %22 : vector<1x1x1xf32> to vector<1x1xf32>
    %c0_i32 = arith.constant 0 : i32
    %24 = arith.index_cast %c0_i32 : i32 to index
    %c0_30 = arith.constant 0 : index
    %25 = vector.load %arg1[%24, %c0_30] : memref<2x512xf32, #tpu.memory_space<vmem>>, vector<1x512xf32>
    %26 = vector.broadcast %1 : vector<16x1xf32> to vector<16x512xf32>
    %27 = vector.broadcast %25 : vector<1x512xf32> to vector<16x512xf32>
    %28 = arith.mulf %26, %27 : vector<16x512xf32>
    %29 = vector.broadcast %3 : vector<16x1xf32> to vector<16x512xf32>
    %30 = arith.addf %28, %29 : vector<16x512xf32>
    %cst = arith.constant 0.000000e+00 : f32
    %31 = vector.broadcast %cst : f32 to vector<16x512xf32>
    %32 = arith.maximumf %30, %31 : vector<16x512xf32>
    %cst_31 = arith.constant dense<0.000000e+00> : vector<16x512xf32>
    %33 = tpu.matmul %5, %32, %cst_31 {dimension_numbers = #tpu.dot_dimension_numbers<[1], [0], [0], [1], [0, 0, 1, 1], [], []>} : vector<16x16xf32>, vector<16x512xf32>, vector<16x512xf32> -> vector<16x512xf32>
    %34 = vector.broadcast %13 : vector<16x1xf32> to vector<16x512xf32>
    %35 = arith.addf %33, %34 : vector<16x512xf32>
    %cst_32 = arith.constant 0.000000e+00 : f32
    %36 = vector.broadcast %cst_32 : f32 to vector<16x512xf32>
    %37 = arith.maximumf %35, %36 : vector<16x512xf32>
    %cst_33 = arith.constant dense<0.000000e+00> : vector<16x512xf32>
    %38 = tpu.matmul %7, %37, %cst_33 {dimension_numbers = #tpu.dot_dimension_numbers<[1], [0], [0], [1], [0, 0, 1, 1], [], []>} : vector<16x16xf32>, vector<16x512xf32>, vector<16x512xf32> -> vector<16x512xf32>
    %39 = vector.broadcast %15 : vector<16x1xf32> to vector<16x512xf32>
    %40 = arith.addf %38, %39 : vector<16x512xf32>
    %cst_34 = arith.constant 0.000000e+00 : f32
    %41 = vector.broadcast %cst_34 : f32 to vector<16x512xf32>
    %42 = arith.maximumf %40, %41 : vector<16x512xf32>
    %cst_35 = arith.constant dense<0.000000e+00> : vector<16x512xf32>
    %43 = tpu.matmul %9, %42, %cst_35 {dimension_numbers = #tpu.dot_dimension_numbers<[1], [0], [0], [1], [0, 0, 1, 1], [], []>} : vector<16x16xf32>, vector<16x512xf32>, vector<16x512xf32> -> vector<16x512xf32>
    %44 = vector.broadcast %17 : vector<16x1xf32> to vector<16x512xf32>
    %45 = arith.addf %43, %44 : vector<16x512xf32>
    %cst_36 = arith.constant 0.000000e+00 : f32
    %46 = vector.broadcast %cst_36 : f32 to vector<16x512xf32>
    %47 = arith.maximumf %45, %46 : vector<16x512xf32>
    %cst_37 = arith.constant dense<0.000000e+00> : vector<16x512xf32>
    %48 = tpu.matmul %11, %47, %cst_37 {dimension_numbers = #tpu.dot_dimension_numbers<[1], [0], [0], [1], [0, 0, 1, 1], [], []>} : vector<16x16xf32>, vector<16x512xf32>, vector<16x512xf32> -> vector<16x512xf32>
    %49 = vector.broadcast %19 : vector<16x1xf32> to vector<16x512xf32>
    %50 = arith.addf %48, %49 : vector<16x512xf32>
    %cst_38 = arith.constant 0.000000e+00 : f32
    %51 = vector.broadcast %cst_38 : f32 to vector<16x512xf32>
    %52 = arith.maximumf %50, %51 : vector<16x512xf32>
    %53 = vector.broadcast %21 : vector<16x1xf32> to vector<16x512xf32>
    %54 = arith.mulf %53, %52 : vector<16x512xf32>
    %cst_39 = arith.constant dense<0.000000e+00> : vector<512xf32>
    %55 = vector.multi_reduction <add>, %54, %cst_39 [0] : vector<16x512xf32> to vector<512xf32>
    %56 = vector.shape_cast %55 : vector<512xf32> to vector<1x512xf32>
    %57 = vector.broadcast %23 : vector<1x1xf32> to vector<1x512xf32>
    %58 = arith.addf %56, %57 : vector<1x512xf32>
    %59 = arith.index_cast %c0_i32 : i32 to index
    %c0_40 = arith.constant 0 : index
    %60 = vector.load %arg4[%59, %c0_40] : memref<2x512xf32, #tpu.memory_space<vmem>>, vector<1x512xf32>
    tpu.vector_store %arg4[%59, %c0_40], %58 {strides = array<i32>} : memref<2x512xf32, #tpu.memory_space<vmem>>, vector<1x512xf32>,
    %c1_i32 = arith.constant 1 : i32
    %61 = arith.index_cast %c1_i32 : i32 to index
    %c0_41 = arith.constant 0 : index
    %62 = vector.load %arg1[%61, %c0_41] : memref<2x512xf32, #tpu.memory_space<vmem>>, vector<1x512xf32>
    %63 = vector.broadcast %1 : vector<16x1xf32> to vector<16x512xf32>
    %64 = vector.broadcast %62 : vector<1x512xf32> to vector<16x512xf32>
    %65 = arith.mulf %63, %64 : vector<16x512xf32>
    %66 = vector.broadcast %3 : vector<16x1xf32> to vector<16x512xf32>
    %67 = arith.addf %65, %66 : vector<16x512xf32>
    %cst_42 = arith.constant 0.000000e+00 : f32
    %68 = vector.broadcast %cst_42 : f32 to vector<16x512xf32>
    %69 = arith.maximumf %67, %68 : vector<16x512xf32>
    %cst_43 = arith.constant dense<0.000000e+00> : vector<16x512xf32>
    %70 = tpu.matmul %5, %69, %cst_43 {dimension_numbers = #tpu.dot_dimension_numbers<[1], [0], [0], [1], [0, 0, 1, 1], [], []>} : vector<16x16xf32>, vector<16x512xf32>, vector<16x512xf32> -> vector<16x512xf32>
    %71 = vector.broadcast %13 : vector<16x1xf32> to vector<16x512xf32>
    %72 = arith.addf %70, %71 : vector<16x512xf32>
    %cst_44 = arith.constant 0.000000e+00 : f32
    %73 = vector.broadcast %cst_44 : f32 to vector<16x512xf32>
    %74 = arith.maximumf %72, %73 : vector<16x512xf32>
    %cst_45 = arith.constant dense<0.000000e+00> : vector<16x512xf32>
    %75 = tpu.matmul %7, %74, %cst_45 {dimension_numbers = #tpu.dot_dimension_numbers<[1], [0], [0], [1], [0, 0, 1, 1], [], []>} : vector<16x16xf32>, vector<16x512xf32>, vector<16x512xf32> -> vector<16x512xf32>
    %76 = vector.broadcast %15 : vector<16x1xf32> to vector<16x512xf32>
    %77 = arith.addf %75, %76 : vector<16x512xf32>
    %cst_46 = arith.constant 0.000000e+00 : f32
    %78 = vector.broadcast %cst_46 : f32 to vector<16x512xf32>
    %79 = arith.maximumf %77, %78 : vector<16x512xf32>
    %cst_47 = arith.constant dense<0.000000e+00> : vector<16x512xf32>
    %80 = tpu.matmul %9, %79, %cst_47 {dimension_numbers = #tpu.dot_dimension_numbers<[1], [0], [0], [1], [0, 0, 1, 1], [], []>} : vector<16x16xf32>, vector<16x512xf32>, vector<16x512xf32> -> vector<16x512xf32>
    %81 = vector.broadcast %17 : vector<16x1xf32> to vector<16x512xf32>
    %82 = arith.addf %80, %81 : vector<16x512xf32>
    %cst_48 = arith.constant 0.000000e+00 : f32
    %83 = vector.broadcast %cst_48 : f32 to vector<16x512xf32>
    %84 = arith.maximumf %82, %83 : vector<16x512xf32>
    %cst_49 = arith.constant dense<0.000000e+00> : vector<16x512xf32>
    %85 = tpu.matmul %11, %84, %cst_49 {dimension_numbers = #tpu.dot_dimension_numbers<[1], [0], [0], [1], [0, 0, 1, 1], [], []>} : vector<16x16xf32>, vector<16x512xf32>, vector<16x512xf32> -> vector<16x512xf32>
    %86 = vector.broadcast %19 : vector<16x1xf32> to vector<16x512xf32>
    %87 = arith.addf %85, %86 : vector<16x512xf32>
    %cst_50 = arith.constant 0.000000e+00 : f32
    %88 = vector.broadcast %cst_50 : f32 to vector<16x512xf32>
    %89 = arith.maximumf %87, %88 : vector<16x512xf32>
    %90 = vector.broadcast %21 : vector<16x1xf32> to vector<16x512xf32>
    %91 = arith.mulf %90, %89 : vector<16x512xf32>
    %cst_51 = arith.constant dense<0.000000e+00> : vector<512xf32>
    %92 = vector.multi_reduction <add>, %91, %cst_51 [0] : vector<16x512xf32> to vector<512xf32>
    %93 = vector.shape_cast %92 : vector<512xf32> to vector<1x512xf32>
    %94 = vector.broadcast %23 : vector<1x1xf32> to vector<1x512xf32>
    %95 = arith.addf %93, %94 : vector<1x512xf32>
    %96 = arith.index_cast %c1_i32 : i32 to index
    %c0_52 = arith.constant 0 : index
    %97 = vector.load %arg4[%96, %c0_52] : memref<2x512xf32, #tpu.memory_space<vmem>>, vector<1x512xf32>
    tpu.vector_store %arg4[%96, %c0_52], %95 {strides = array<i32>} : memref<2x512xf32, #tpu.memory_space<vmem>>, vector<1x512xf32>,
    %c2_i32 = arith.constant 2 : i32
    return
  }
  func.func @transform_0(%arg0: i32) -> (i32, i32) {
    %c0_i32 = arith.constant 0 : i32
    %c0_i32_0 = arith.constant 0 : i32
    return %arg0, %c0_i32 : i32, i32
  }
  func.func @transform_1(%arg0: i32) -> (i32, i32, i32) {
    %c0_i32 = arith.constant 0 : i32
    %c0_i32_0 = arith.constant 0 : i32
    %c0_i32_1 = arith.constant 0 : i32
    %c0_i32_2 = arith.constant 0 : i32
    return %c0_i32, %c0_i32_0, %c0_i32_1 : i32, i32, i32
  }
  func.func @transform_2(%arg0: i32) -> (i32, i32, i32) {
    %c0_i32 = arith.constant 0 : i32
    %c0_i32_0 = arith.constant 0 : i32
    %c0_i32_1 = arith.constant 0 : i32
    %c0_i32_2 = arith.constant 0 : i32
    return %c0_i32, %c0_i32_0, %c0_i32_1 : i32, i32, i32
  }
  func.func @transform_3(%arg0: i32) -> (i32, i32) {
    %c0_i32 = arith.constant 0 : i32
    %c0_i32_0 = arith.constant 0 : i32
    return %arg0, %c0_i32 : i32, i32
  }
}

</mosaic_0001>

<llo_original>
// kernel: tpu_custom_call.1
$region0: #{tpu_custom_call.1}
  #allocation0 [shape = 'u32[]', space=smem, size = 0x4, offset = 0x4, fixed_abs, tag = 'smem constant byte address 0x4 - core index']
  #allocation1 [shape = 'u32[144,128]{1,0:T(1,128)}', space=vmem, size = 0x12000, scoped, tag = 'internal scratch']
  %s0 = inlined_call_operand.vmem [shape: f32[2,512], index: 0, kind: input, shape index: {}]
  %s1 = inlined_call_operand.vmem [shape: f32[6,16,16], index: 1, kind: input, shape index: {}]
  %s2 = inlined_call_operand.vmem [shape: f32[6,16,1], index: 2, kind: input, shape index: {}]
  %s3 = inlined_call_operand.hbm [shape: f32[2,512], index: 3, kind: output, shape index: {}]
  %s4 = sld [smem:[#allocation0]]
  $region22: #{tpu_custom_call.1} parent=0
    _
  %s6 = ssub.s32 1, %s4
  %s7 = scalar_select 0, %s6, %s4
  $region1: #{tpu_custom_call.1} parent=0
    #allocation2 [shape = 'u8[4096]{0}', space=vmem, size = 0x1000, scoped, tag = 'output window, operand 0, single buffered']
    #allocation3 [shape = 's32[1]{0}', space=sflag, size = 0x4, scoped, tag = 'scoped memory for tpu_custom_call.1']
    %8 = vsyncpa [#allocation3], 0
    // Predicated region
    $region2: #{tpu_custom_call.1} parent=1 // pred_check
      _
    $region3: #{tpu_custom_call.1} parent=1 // pred_check_branch
      %10 = sbr.rel (0) target = $region5
    $region4: #{tpu_custom_call.1} parent=1 // pred_region
      _
    $region5: #{tpu_custom_call.1} parent=1 // pred_fallthru
      _
    // Predicated region
    $region6: #{tpu_custom_call.1} parent=1 // pred_check
      _
    $region7: #{tpu_custom_call.1} parent=1 // pred_check_branch
      %12 = sbr.rel (0) target = $region9
    $region8: #{tpu_custom_call.1} parent=1 // pred_region
      _
    $region9: #{tpu_custom_call.1} parent=1 // pred_fallthru
      _
    // Predicated region
    $region10: #{tpu_custom_call.1} parent=1 // pred_check
      _
    $region11: #{tpu_custom_call.1} parent=1 // pred_check_branch
      %14 = sbr.rel (0) target = $region13
    $region12: #{tpu_custom_call.1} parent=1 // pred_region
      _
    $region13: #{tpu_custom_call.1} parent=1 // pred_fallthru
      _
    %v15 = vld [vmem:[%s1] sm:$0xff]
    %v16 = vld [vmem:[%s1 + $0x8] sm:$0xff]
    %v17 = vld [vmem:[%s2] sm:$0xff]
    %v18 = vld [vmem:[%s2 + $0x8] sm:$0xff]
    %s19 = scalar_lea.vmem %s1, 16
    %v20 = vld [vmem:[%s19] sm:$0xff]
    %v21 = vld [vmem:[%s19 + $0x8] sm:$0xff]
    %s22 = scalar_lea.vmem %s1, 32
    %v23 = vld [vmem:[%s22] sm:$0xff]
    %v24 = vld [vmem:[%s22 + $0x8] sm:$0xff]
    %s25 = scalar_lea.vmem %s1, 48
    %v26 = vld [vmem:[%s25] sm:$0xff]
    %v27 = vld [vmem:[%s25 + $0x8] sm:$0xff]
    %s28 = scalar_lea.vmem %s1, 64
    %v29 = vld [vmem:[%s28] sm:$0xff]
    %v30 = vld [vmem:[%s28 + $0x8] sm:$0xff]
    %s31 = scalar_lea.vmem %s2, 16
    %v32 = vld [vmem:[%s31] sm:$0xff]
    %v33 = vld [vmem:[%s31 + $0x8] sm:$0xff]
    %s34 = scalar_lea.vmem %s2, 32
    %v35 = vld [vmem:[%s34] sm:$0xff]
    %v36 = vld [vmem:[%s34 + $0x8] sm:$0xff]
    %s37 = scalar_lea.vmem %s2, 48
    %v38 = vld [vmem:[%s37] sm:$0xff]
    %v39 = vld [vmem:[%s37 + $0x8] sm:$0xff]
    %s40 = scalar_lea.vmem %s2, 64
    %v41 = vld [vmem:[%s40] sm:$0xff]
    %v42 = vld [vmem:[%s40 + $0x8] sm:$0xff]
    %s43 = scalar_lea.vmem %s1, 80
    %v44 = vld [vmem:[%s43] sm:$0xff]
    %v45 = vld [vmem:[%s43 + $0x8] sm:$0xff]
    %s46 = scalar_lea.vmem %s2, 80
    %v47 = vld [vmem:[%s46] sm:$0x1]
    %v48 = vld [vmem:[%s0] ss:$2 sm:$0xf]
    %50 = vset.pattern.permute.xlu0 0
    %51 = vperm.xlu0 %50, %v15
    %v52 = vpop.permute.xlu0 %51
    %55 = vset.pattern.permute.xlu0 0
    %56 = vperm.xlu0 %55, %v16
    %v57 = vpop.permute.xlu0 %56
    %v60 = vlaneseq
    %v61 = vshrl.u32 %v60, 7
    %v62 = vsub.s32 0, %v61
    %v63 = vrot.slane %v48, %v62
    %v64 = vlaneseq
    %v65 = vshrl.u32 %v64, 7
    %v66 = vsub.s32 1, %v65
    %v67 = vrot.slane %v48, %v66
    %v68 = vlaneseq
    %v69 = vshrl.u32 %v68, 7
    %v70 = vsub.s32 2, %v69
    %v71 = vrot.slane %v48, %v70
    %v72 = vlaneseq
    %v73 = vshrl.u32 %v72, 7
    %v74 = vsub.s32 3, %v73
    %v75 = vrot.slane %v48, %v74
    %v80 = vmul.f32 %v52, %v63
    %v81 = vmul.f32 %v52, %v67
    %v82 = vmul.f32 %v52, %v71
    %v83 = vmul.f32 %v52, %v75
    %v84 = vmul.f32 %v57, %v63
    %v85 = vmul.f32 %v57, %v67
    %v86 = vmul.f32 %v57, %v71
    %v87 = vmul.f32 %v57, %v75
    %89 = vset.pattern.permute.xlu0 0
    %90 = vperm.xlu0 %89, %v17
    %v91 = vpop.permute.xlu0 %90
    %94 = vset.pattern.permute.xlu0 0
    %95 = vperm.xlu0 %94, %v18
    %v96 = vpop.permute.xlu0 %95
    %v98 = vadd.f32 %v80, %v91
    %v99 = vadd.f32 %v81, %v91
    %v100 = vadd.f32 %v82, %v91
    %v101 = vadd.f32 %v83, %v91
    %v102 = vadd.f32 %v84, %v96
    %v103 = vadd.f32 %v85, %v96
    %v104 = vadd.f32 %v86, %v96
    %v105 = vadd.f32 %v87, %v96
    %v106 = vmax.f32 %v98, 0.0
    %v107 = vmax.f32 %v99, 0.0
    %v108 = vmax.f32 %v100, 0.0
    %v109 = vmax.f32 %v101, 0.0
    %v110 = vmax.f32 %v102, 0.0
    %v111 = vmax.f32 %v103, 0.0
    %v112 = vmax.f32 %v104, 0.0
    %v113 = vmax.f32 %v105, 0.0
    %115 = vset.pattern.permute.xlu0 0
    %116 = vperm.xlu0 %115, %v32
    %v117 = vpop.permute.xlu0 %116
    %120 = vset.pattern.permute.xlu0 0
    %121 = vperm.xlu0 %120, %v33
    %v122 = vpop.permute.xlu0 %121
    %vm124 = vcmask 130048
    %v126 = vsel %vm124, %v20, 0
    %v129 = vsel %vm124, %v21, 0
    %131 = vmatprep.subr.mxu0 %v107
    %132 = vmatpush1.msra.mxu0 %v106
    %133 = vmatprep.subr.mxu0 %v111
    %134 = vmatpush1.msra.mxu0 %v110
    %135 = vmatprep.subr.mxu0 0.0
    %136 = vmatpush1.msra.mxu0 0.0
    %137 = vmatprep.subr.mxu0 0.0
    %138 = vmatpush1.msra.mxu0 0.0
    %139 = vmatprep.subr.mxu0 0.0
    %140 = vmatpush1.msra.mxu0 0.0
    %141 = vmatprep.subr.mxu0 0.0
    %142 = vmatpush1.msra.mxu0 0.0
    %143 = vmatprep.subr.mxu0 0.0
    %144 = vmatpush1.msra.mxu0 0.0
    %145 = vmatprep.subr.mxu0 0.0
    %146 = vmatpush1.msra.mxu0 0.0
    %147 = vmatprep.subr.mxu0 0.0
    %148 = vmatpush1.msra.mxu0 0.0
    %149 = vmatprep.subr.mxu0 0.0
    %150 = vmatpush1.msra.mxu0 0.0
    %151 = vmatprep.subr.mxu0 0.0
    %152 = vmatpush1.msra.mxu0 0.0
    %153 = vmatprep.subr.mxu0 0.0
    %154 = vmatpush1.msra.mxu0 0.0
    %155 = vmatprep.subr.mxu0 0.0
    %156 = vmatpush1.msra.mxu0 0.0
    %157 = vmatprep.subr.mxu0 0.0
    %158 = vmatpush1.msra.mxu0 0.0
    %159 = vmatprep.subr.mxu0 0.0
    %160 = vmatpush1.msra.mxu0 0.0
    %161 = vmatprep.subr.mxu0 0.0
    %162 = vmatpush1.msra.mxu0 0.0
    %163 = vmatprep.subr.mxu0 0.0
    %164 = vmatpush1.msra.mxu0 0.0
    %165 = vmatprep.subr.mxu0 0.0
    %166 = vmatpush1.msra.mxu0 0.0
    %167 = vmatprep.subr.mxu0 0.0
    %168 = vmatpush1.msra.mxu0 0.0
    %169 = vmatprep.subr.mxu0 0.0
    %170 = vmatpush1.msra.mxu0 0.0
    %171 = vmatprep.subr.mxu0 0.0
    %172 = vmatpush1.msra.mxu0 0.0
    %173 = vmatprep.subr.mxu0 0.0
    %174 = vmatpush1.msra.mxu0 0.0
    %175 = vmatprep.subr.mxu0 0.0
    %176 = vmatpush1.msra.mxu0 0.0
    %177 = vmatprep.subr.mxu0 0.0
    %178 = vmatpush1.msra.mxu0 0.0
    %179 = vmatprep.subr.mxu0 0.0
    %180 = vmatpush1.msra.mxu0 0.0
    %181 = vmatprep.subr.mxu0 0.0
    %182 = vmatpush1.msra.mxu0 0.0
    %183 = vmatprep.subr.mxu0 0.0
    %184 = vmatpush1.msra.mxu0 0.0
    %185 = vmatprep.subr.mxu0 0.0
    %186 = vmatpush1.msra.mxu0 0.0
    %187 = vmatprep.subr.mxu0 0.0
    %188 = vmatpush1.msra.mxu0 0.0
    %189 = vmatprep.subr.mxu0 0.0
    %190 = vmatpush1.msra.mxu0 0.0
    %191 = vmatprep.subr.mxu0 0.0
    %192 = vmatpush1.msra.mxu0 0.0
    %193 = vmatprep.subr.mxu0 0.0
    %194 = vmatpush1.msra.mxu0 0.0
    %195 = vmatprep.mubr.f32.mxu0 0.0
    %196 = vmatmul.mubr.f32.gmra.mrb[0].mxu0 %v126
    %v197 = vpop.f32.mrb[0].mxu0
    %v198 = vadd.f32 %v117, %v197
    %v199 = vpop.f32.mrb[0].mxu0
    %v200 = vadd.f32 %v117, %v199
    %201 = vmatprep.mubr.f32.mxu0 0.0
    %202 = vmatmul.mubr.f32.gmra.mrb[0].mxu0 %v129
    %v203 = vpop.f32.mrb[0].mxu0
    %v204 = vadd.f32 %v122, %v203
    %v205 = vpop.f32.mrb[0].mxu0
    %v206 = vadd.f32 %v122, %v205
    %207 = vdwg.mxu0
    %208 = vmatprep.subr.mxu0 %v109
    %209 = vmatpush1.msra.mxu0 %v108
    %210 = vmatprep.subr.mxu0 %v113
    %211 = vmatpush1.msra.mxu0 %v112
    %212 = vmatprep.subr.mxu0 0.0
    %213 = vmatpush1.msra.mxu0 0.0
    %214 = vmatprep.subr.mxu0 0.0
    %215 = vmatpush1.msra.mxu0 0.0
    %216 = vmatprep.subr.mxu0 0.0
    %217 = vmatpush1.msra.mxu0 0.0
    %218 = vmatprep.subr.mxu0 0.0
    %219 = vmatpush1.msra.mxu0 0.0
    %220 = vmatprep.subr.mxu0 0.0
    %221 = vmatpush1.msra.mxu0 0.0
    %222 = vmatprep.subr.mxu0 0.0
    %223 = vmatpush1.msra.mxu0 0.0
    %224 = vmatprep.subr.mxu0 0.0
    %225 = vmatpush1.msra.mxu0 0.0
    %226 = vmatprep.subr.mxu0 0.0
    %227 = vmatpush1.msra.mxu0 0.0
    %228 = vmatprep.subr.mxu0 0.0
    %229 = vmatpush1.msra.mxu0 0.0
    %230 = vmatprep.subr.mxu0 0.0
    %231 = vmatpush1.msra.mxu0 0.0
    %232 = vmatprep.subr.mxu0 0.0
    %233 = vmatpush1.msra.mxu0 0.0
    %234 = vmatprep.subr.mxu0 0.0
    %235 = vmatpush1.msra.mxu0 0.0
    %236 = vmatprep.subr.mxu0 0.0
    %237 = vmatpush1.msra.mxu0 0.0
    %238 = vmatprep.subr.mxu0 0.0
    %239 = vmatpush1.msra.mxu0 0.0
    %240 = vmatprep.subr.mxu0 0.0
    %241 = vmatpush1.msra.mxu0 0.0
    %242 = vmatprep.subr.mxu0 0.0
    %243 = vmatpush1.msra.mxu0 0.0
    %244 = vmatprep.subr.mxu0 0.0
    %245 = vmatpush1.msra.mxu0 0.0
    %246 = vmatprep.subr.mxu0 0.0
    %247 = vmatpush1.msra.mxu0 0.0
    %248 = vmatprep.subr.mxu0 0.0
    %249 = vmatpush1.msra.mxu0 0.0
    %250 = vmatprep.subr.mxu0 0.0
    %251 = vmatpush1.msra.mxu0 0.0
    %252 = vmatprep.subr.mxu0 0.0
    %253 = vmatpush1.msra.mxu0 0.0
    %254 = vmatprep.subr.mxu0 0.0
    %255 = vmatpush1.msra.mxu0 0.0
    %256 = vmatprep.subr.mxu0 0.0
    %257 = vmatpush1.msra.mxu0 0.0
    %258 = vmatprep.subr.mxu0 0.0
    %259 = vmatpush1.msra.mxu0 0.0
    %260 = vmatprep.subr.mxu0 0.0
    %261 = vmatpush1.msra.mxu0 0.0
    %262 = vmatprep.subr.mxu0 0.0
    %263 = vmatpush1.msra.mxu0 0.0
    %264 = vmatprep.subr.mxu0 0.0
    %265 = vmatpush1.msra.mxu0 0.0
    %266 = vmatprep.subr.mxu0 0.0
    %267 = vmatpush1.msra.mxu0 0.0
    %268 = vmatprep.subr.mxu0 0.0
    %269 = vmatpush1.msra.mxu0 0.0
    %270 = vmatprep.subr.mxu0 0.0
    %271 = vmatpush1.msra.mxu0 0.0
    %272 = vmatprep.mubr.f32.mxu0 0.0
    %273 = vmatmul.mubr.f32.gmra.mrb[0].mxu0 %v126
    %v274 = vpop.f32.mrb[0].mxu0
    %v275 = vadd.f32 %v117, %v274
    %v276 = vpop.f32.mrb[0].mxu0
    %v277 = vadd.f32 %v117, %v276
    %278 = vmatprep.mubr.f32.mxu0 0.0
    %279 = vmatmul.mubr.f32.gmra.mrb[0].mxu0 %v129
    %v280 = vpop.f32.mrb[0].mxu0
    %v281 = vadd.f32 %v122, %v280
    %v282 = vpop.f32.mrb[0].mxu0
    %v283 = vadd.f32 %v122, %v282
    %284 = vdwg.mxu0
    %v285 = vmax.f32 %v198, 0.0
    %v286 = vmax.f32 %v200, 0.0
    %v287 = vmax.f32 %v275, 0.0
    %v288 = vmax.f32 %v277, 0.0
    %v289 = vmax.f32 %v204, 0.0
    %v290 = vmax.f32 %v206, 0.0
    %v291 = vmax.f32 %v281, 0.0
    %v292 = vmax.f32 %v283, 0.0
    %294 = vset.pattern.permute.xlu0 0
    %295 = vperm.xlu0 %294, %v35
    %v296 = vpop.permute.xlu0 %295
    %299 = vset.pattern.permute.xlu0 0
    %300 = vperm.xlu0 %299, %v36
    %v301 = vpop.permute.xlu0 %300
    %v304 = vsel %vm124, %v23, 0
    %v307 = vsel %vm124, %v24, 0
    %309 = vmatprep.subr.mxu0 %v286
    %310 = vmatpush1.msra.mxu0 %v285
    %311 = vmatprep.subr.mxu0 %v290
    %312 = vmatpush1.msra.mxu0 %v289
    %313 = vmatprep.subr.mxu0 0.0
    %314 = vmatpush1.msra.mxu0 0.0
    %315 = vmatprep.subr.mxu0 0.0
    %316 = vmatpush1.msra.mxu0 0.0
    %317 = vmatprep.subr.mxu0 0.0
    %318 = vmatpush1.msra.mxu0 0.0
    %319 = vmatprep.subr.mxu0 0.0
    %320 = vmatpush1.msra.mxu0 0.0
    %321 = vmatprep.subr.mxu0 0.0
    %322 = vmatpush1.msra.mxu0 0.0
    %323 = vmatprep.subr.mxu0 0.0
    %324 = vmatpush1.msra.mxu0 0.0
    %325 = vmatprep.subr.mxu0 0.0
    %326 = vmatpush1.msra.mxu0 0.0
    %327 = vmatprep.subr.mxu0 0.0
    %328 = vmatpush1.msra.mxu0 0.0
    %329 = vmatprep.subr.mxu0 0.0
    %330 = vmatpush1.msra.mxu0 0.0
    %331 = vmatprep.subr.mxu0 0.0
    %332 = vmatpush1.msra.mxu0 0.0
    %333 = vmatprep.subr.mxu0 0.0
    %334 = vmatpush1.msra.mxu0 0.0
    %335 = vmatprep.subr.mxu0 0.0
    %336 = vmatpush1.msra.mxu0 0.0
    %337 = vmatprep.subr.mxu0 0.0
    %338 = vmatpush1.msra.mxu0 0.0
    %339 = vmatprep.subr.mxu0 0.0
    %340 = vmatpush1.msra.mxu0 0.0
    %341 = vmatprep.subr.mxu0 0.0
    %342 = vmatpush1.msra.mxu0 0.0
    %343 = vmatprep.subr.mxu0 0.0
    %344 = vmatpush1.msra.mxu0 0.0
    %345 = vmatprep.subr.mxu0 0.0
    %346 = vmatpush1.msra.mxu0 0.0
    %347 = vmatprep.subr.mxu0 0.0
    %348 = vmatpush1.msra.mxu0 0.0
    %349 = vmatprep.subr.mxu0 0.0
    %350 = vmatpush1.msra.mxu0 0.0
    %351 = vmatprep.subr.mxu0 0.0
    %352 = vmatpush1.msra.mxu0 0.0
    %353 = vmatprep.subr.mxu0 0.0
    %354 = vmatpush1.msra.mxu0 0.0
    %355 = vmatprep.subr.mxu0 0.0
    %356 = vmatpush1.msra.mxu0 0.0
    %357 = vmatprep.subr.mxu0 0.0
    %358 = vmatpush1.msra.mxu0 0.0
    %359 = vmatprep.subr.mxu0 0.0
    %360 = vmatpush1.msra.mxu0 0.0
    %361 = vmatprep.subr.mxu0 0.0
    %362 = vmatpush1.msra.mxu0 0.0
    %363 = vmatprep.subr.mxu0 0.0
    %364 = vmatpush1.msra.mxu0 0.0
    %365 = vmatprep.subr.mxu0 0.0
    %366 = vmatpush1.msra.mxu0 0.0
    %367 = vmatprep.subr.mxu0 0.0
    %368 = vmatpush1.msra.mxu0 0.0
    %369 = vmatprep.subr.mxu0 0.0
    %370 = vmatpush1.msra.mxu0 0.0
    %371 = vmatprep.subr.mxu0 0.0
    %372 = vmatpush1.msra.mxu0 0.0
    %373 = vmatprep.mubr.f32.mxu0 0.0
    %374 = vmatmul.mubr.f32.gmra.mrb[0].mxu0 %v304
    %v375 = vpop.f32.mrb[0].mxu0
    %v376 = vadd.f32 %v296, %v375
    %v377 = vpop.f32.mrb[0].mxu0
    %v378 = vadd.f32 %v296, %v377
    %379 = vmatprep.mubr.f32.mxu0 0.0
    %380 = vmatmul.mubr.f32.gmra.mrb[0].mxu0 %v307
    %v381 = vpop.f32.mrb[0].mxu0
    %v382 = vadd.f32 %v301, %v381
    %v383 = vpop.f32.mrb[0].mxu0
    %v384 = vadd.f32 %v301, %v383
    %385 = vdwg.mxu0
    %386 = vmatprep.subr.mxu0 %v288
    %387 = vmatpush1.msra.mxu0 %v287
    %388 = vmatprep.subr.mxu0 %v292
    %389 = vmatpush1.msra.mxu0 %v291
    %390 = vmatprep.subr.mxu0 0.0
    %391 = vmatpush1.msra.mxu0 0.0
    %392 = vmatprep.subr.mxu0 0.0
    %393 = vmatpush1.msra.mxu0 0.0
    %394 = vmatprep.subr.mxu0 0.0
    %395 = vmatpush1.msra.mxu0 0.0
    %396 = vmatprep.subr.mxu0 0.0
    %397 = vmatpush1.msra.mxu0 0.0
    %398 = vmatprep.subr.mxu0 0.0
    %399 = vmatpush1.msra.mxu0 0.0
    %400 = vmatprep.subr.mxu0 0.0
    %401 = vmatpush1.msra.mxu0 0.0
    %402 = vmatprep.subr.mxu0 0.0
    %403 = vmatpush1.msra.mxu0 0.0
    %404 = vmatprep.subr.mxu0 0.0
    %405 = vmatpush1.msra.mxu0 0.0
    %406 = vmatprep.subr.mxu0 0.0
    %407 = vmatpush1.msra.mxu0 0.0
    %408 = vmatprep.subr.mxu0 0.0
    %409 = vmatpush1.msra.mxu0 0.0
    %410 = vmatprep.subr.mxu0 0.0
    %411 = vmatpush1.msra.mxu0 0.0
    %412 = vmatprep.subr.mxu0 0.0
    %413 = vmatpush1.msra.mxu0 0.0
    %414 = vmatprep.subr.mxu0 0.0
    %415 = vmatpush1.msra.mxu0 0.0
    %416 = vmatprep.subr.mxu0 0.0
    %417 = vmatpush1.msra.mxu0 0.0
    %418 = vmatprep.subr.mxu0 0.0
    %419 = vmatpush1.msra.mxu0 0.0
    %420 = vmatprep.subr.mxu0 0.0
    %421 = vmatpush1.msra.mxu0 0.0
    %422 = vmatprep.subr.mxu0 0.0
    %423 = vmatpush1.msra.mxu0 0.0
    %424 = vmatprep.subr.mxu0 0.0
    %425 = vmatpush1.msra.mxu0 0.0
    %426 = vmatprep.subr.mxu0 0.0
    %427 = vmatpush1.msra.mxu0 0.0
    %428 = vmatprep.subr.mxu0 0.0
    %429 = vmatpush1.msra.mxu0 0.0
    %430 = vmatprep.subr.mxu0 0.0
    %431 = vmatpush1.msra.mxu0 0.0
    %432 = vmatprep.subr.mxu0 0.0
    %433 = vmatpush1.msra.mxu0 0.0
    %434 = vmatprep.subr.mxu0 0.0
    %435 = vmatpush1.msra.mxu0 0.0
    %436 = vmatprep.subr.mxu0 0.0
    %437 = vmatpush1.msra.mxu0 0.0
    %438 = vmatprep.subr.mxu0 0.0
    %439 = vmatpush1.msra.mxu0 0.0
    %440 = vmatprep.subr.mxu0 0.0
    %441 = vmatpush1.msra.mxu0 0.0
    %442 = vmatprep.subr.mxu0 0.0
    %443 = vmatpush1.msra.mxu0 0.0
    %444 = vmatprep.subr.mxu0 0.0
    %445 = vmatpush1.msra.mxu0 0.0
    %446 = vmatprep.subr.mxu0 0.0
    %447 = vmatpush1.msra.mxu0 0.0
    %448 = vmatprep.subr.mxu0 0.0
    %449 = vmatpush1.msra.mxu0 0.0
    %450 = vmatprep.mubr.f32.mxu0 0.0
    %451 = vmatmul.mubr.f32.gmra.mrb[0].mxu0 %v304
    %v452 = vpop.f32.mrb[0].mxu0
    %v453 = vadd.f32 %v296, %v452
    %v454 = vpop.f32.mrb[0].mxu0
    %v455 = vadd.f32 %v296, %v454
    %456 = vmatprep.mubr.f32.mxu0 0.0
    %457 = vmatmul.mubr.f32.gmra.mrb[0].mxu0 %v307
    %v458 = vpop.f32.mrb[0].mxu0
    %v459 = vadd.f32 %v301, %v458
    %v460 = vpop.f32.mrb[0].mxu0
    %v461 = vadd.f32 %v301, %v460
    %462 = vdwg.mxu0
    %v463 = vmax.f32 %v376, 0.0
    %v464 = vmax.f32 %v378, 0.0
    %v465 = vmax.f32 %v453, 0.0
    %v466 = vmax.f32 %v455, 0.0
    %v467 = vmax.f32 %v382, 0.0
    %v468 = vmax.f32 %v384, 0.0
    %v469 = vmax.f32 %v459, 0.0
    %v470 = vmax.f32 %v461, 0.0
    %472 = vset.pattern.permute.xlu0 0
    %473 = vperm.xlu0 %472, %v38
    %v474 = vpop.permute.xlu0 %473
    %477 = vset.pattern.permute.xlu0 0
    %478 = vperm.xlu0 %477, %v39
    %v479 = vpop.permute.xlu0 %478
    %v482 = vsel %vm124, %v26, 0
    %v485 = vsel %vm124, %v27, 0
    %487 = vmatprep.subr.mxu0 %v464
    %488 = vmatpush1.msra.mxu0 %v463
    %489 = vmatprep.subr.mxu0 %v468
    %490 = vmatpush1.msra.mxu0 %v467
    %491 = vmatprep.subr.mxu0 0.0
    %492 = vmatpush1.msra.mxu0 0.0
    %493 = vmatprep.subr.mxu0 0.0
    %494 = vmatpush1.msra.mxu0 0.0
    %495 = vmatprep.subr.mxu0 0.0
    %496 = vmatpush1.msra.mxu0 0.0
    %497 = vmatprep.subr.mxu0 0.0
    %498 = vmatpush1.msra.mxu0 0.0
    %499 = vmatprep.subr.mxu0 0.0
    %500 = vmatpush1.msra.mxu0 0.0
    %501 = vmatprep.subr.mxu0 0.0
    %502 = vmatpush1.msra.mxu0 0.0
    %503 = vmatprep.subr.mxu0 0.0
    %504 = vmatpush1.msra.mxu0 0.0
    %505 = vmatprep.subr.mxu0 0.0
    %506 = vmatpush1.msra.mxu0 0.0
    %507 = vmatprep.subr.mxu0 0.0
    %508 = vmatpush1.msra.mxu0 0.0
    %509 = vmatprep.subr.mxu0 0.0
    %510 = vmatpush1.msra.mxu0 0.0
    %511 = vmatprep.subr.mxu0 0.0
    %512 = vmatpush1.msra.mxu0 0.0
    %513 = vmatprep.subr.mxu0 0.0
    %514 = vmatpush1.msra.mxu0 0.0
    %515 = vmatprep.subr.mxu0 0.0
    %516 = vmatpush1.msra.mxu0 0.0
    %517 = vmatprep.subr.mxu0 0.0
    %518 = vmatpush1.msra.mxu0 0.0
    %519 = vmatprep.subr.mxu0 0.0
    %520 = vmatpush1.msra.mxu0 0.0
    %521 = vmatprep.subr.mxu0 0.0
    %522 = vmatpush1.msra.mxu0 0.0
    %523 = vmatprep.subr.mxu0 0.0
    %524 = vmatpush1.msra.mxu0 0.0
    %525 = vmatprep.subr.mxu0 0.0
    %526 = vmatpush1.msra.mxu0 0.0
    %527 = vmatprep.subr.mxu0 0.0
    %528 = vmatpush1.msra.mxu0 0.0
    %529 = vmatprep.subr.mxu0 0.0
    %530 = vmatpush1.msra.mxu0 0.0
    %531 = vmatprep.subr.mxu0 0.0
    %532 = vmatpush1.msra.mxu0 0.0
    %533 = vmatprep.subr.mxu0 0.0
    %534 = vmatpush1.msra.mxu0 0.0
    %535 = vmatprep.subr.mxu0 0.0
    %536 = vmatpush1.msra.mxu0 0.0
    %537 = vmatprep.subr.mxu0 0.0
    %538 = vmatpush1.msra.mxu0 0.0
    %539 = vmatprep.subr.mxu0 0.0
    %540 = vmatpush1.msra.mxu0 0.0
    %541 = vmatprep.subr.mxu0 0.0
    %542 = vmatpush1.msra.mxu0 0.0
    %543 = vmatprep.subr.mxu0 0.0
    %544 = vmatpush1.msra.mxu0 0.0
    %545 = vmatprep.subr.mxu0 0.0
    %546 = vmatpush1.msra.mxu0 0.0
    %547 = vmatprep.subr.mxu0 0.0
    %548 = vmatpush1.msra.mxu0 0.0
    %549 = vmatprep.subr.mxu0 0.0
    %550 = vmatpush1.msra.mxu0 0.0
    %551 = vmatprep.mubr.f32.mxu0 0.0
    %552 = vmatmul.mubr.f32.gmra.mrb[0].mxu0 %v482
    %v553 = vpop.f32.mrb[0].mxu0
    %v554 = vadd.f32 %v474, %v553
    %v555 = vpop.f32.mrb[0].mxu0
    %v556 = vadd.f32 %v474, %v555
    %557 = vmatprep.mubr.f32.mxu0 0.0
    %558 = vmatmul.mubr.f32.gmra.mrb[0].mxu0 %v485
    %v559 = vpop.f32.mrb[0].mxu0
    %v560 = vadd.f32 %v479, %v559
    %v561 = vpop.f32.mrb[0].mxu0
    %v562 = vadd.f32 %v479, %v561
    %563 = vdwg.mxu0
    %564 = vmatprep.subr.mxu0 %v466
    %565 = vmatpush1.msra.mxu0 %v465
    %566 = vmatprep.subr.mxu0 %v470
    %567 = vmatpush1.msra.mxu0 %v469
    %568 = vmatprep.subr.mxu0 0.0
    %569 = vmatpush1.msra.mxu0 0.0
    %570 = vmatprep.subr.mxu0 0.0
    %571 = vmatpush1.msra.mxu0 0.0
    %572 = vmatprep.subr.mxu0 0.0
    %573 = vmatpush1.msra.mxu0 0.0
    %574 = vmatprep.subr.mxu0 0.0
    %575 = vmatpush1.msra.mxu0 0.0
    %576 = vmatprep.subr.mxu0 0.0
    %577 = vmatpush1.msra.mxu0 0.0
    %578 = vmatprep.subr.mxu0 0.0
    %579 = vmatpush1.msra.mxu0 0.0
    %580 = vmatprep.subr.mxu0 0.0
    %581 = vmatpush1.msra.mxu0 0.0
    %582 = vmatprep.subr.mxu0 0.0
    %583 = vmatpush1.msra.mxu0 0.0
    %584 = vmatprep.subr.mxu0 0.0
    %585 = vmatpush1.msra.mxu0 0.0
    %586 = vmatprep.subr.mxu0 0.0
    %587 = vmatpush1.msra.mxu0 0.0
    %588 = vmatprep.subr.mxu0 0.0
    %589 = vmatpush1.msra.mxu0 0.0
    %590 = vmatprep.subr.mxu0 0.0
    %591 = vmatpush1.msra.mxu0 0.0
    %592 = vmatprep.subr.mxu0 0.0
    %593 = vmatpush1.msra.mxu0 0.0
    %594 = vmatprep.subr.mxu0 0.0
    %595 = vmatpush1.msra.mxu0 0.0
    %596 = vmatprep.subr.mxu0 0.0
    %597 = vmatpush1.msra.mxu0 0.0
    %598 = vmatprep.subr.mxu0 0.0
    %599 = vmatpush1.msra.mxu0 0.0
    %600 = vmatprep.subr.mxu0 0.0
    %601 = vmatpush1.msra.mxu0 0.0
    %602 = vmatprep.subr.mxu0 0.0
    %603 = vmatpush1.msra.mxu0 0.0
    %604 = vmatprep.subr.mxu0 0.0
    %605 = vmatpush1.msra.mxu0 0.0
    %606 = vmatprep.subr.mxu0 0.0
    %607 = vmatpush1.msra.mxu0 0.0
    %608 = vmatprep.subr.mxu0 0.0
    %609 = vmatpush1.msra.mxu0 0.0
    %610 = vmatprep.subr.mxu0 0.0
    %611 = vmatpush1.msra.mxu0 0.0
    %612 = vmatprep.subr.mxu0 0.0
    %613 = vmatpush1.msra.mxu0 0.0
    %614 = vmatprep.subr.mxu0 0.0
    %615 = vmatpush1.msra.mxu0 0.0
    %616 = vmatprep.subr.mxu0 0.0
    %617 = vmatpush1.msra.mxu0 0.0
    %618 = vmatprep.subr.mxu0 0.0
    %619 = vmatpush1.msra.mxu0 0.0
    %620 = vmatprep.subr.mxu0 0.0
    %621 = vmatpush1.msra.mxu0 0.0
    %622 = vmatprep.subr.mxu0 0.0
    %623 = vmatpush1.msra.mxu0 0.0
    %624 = vmatprep.subr.mxu0 0.0
    %625 = vmatpush1.msra.mxu0 0.0
    %626 = vmatprep.subr.mxu0 0.0
    %627 = vmatpush1.msra.mxu0 0.0
    %628 = vmatprep.mubr.f32.mxu0 0.0
    %629 = vmatmul.mubr.f32.gmra.mrb[0].mxu0 %v482
    %v630 = vpop.f32.mrb[0].mxu0
    %v631 = vadd.f32 %v474, %v630
    %v632 = vpop.f32.mrb[0].mxu0
    %v633 = vadd.f32 %v474, %v632
    %634 = vmatprep.mubr.f32.mxu0 0.0
    %635 = vmatmul.mubr.f32.gmra.mrb[0].mxu0 %v485
    %v636 = vpop.f32.mrb[0].mxu0
    %v637 = vadd.f32 %v479, %v636
    %v638 = vpop.f32.mrb[0].mxu0
    %v639 = vadd.f32 %v479, %v638
    %640 = vdwg.mxu0
    %v641 = vmax.f32 %v554, 0.0
    %v642 = vmax.f32 %v556, 0.0
    %v643 = vmax.f32 %v631, 0.0
    %v644 = vmax.f32 %v633, 0.0
    %v645 = vmax.f32 %v560, 0.0
    %v646 = vmax.f32 %v562, 0.0
    %v647 = vmax.f32 %v637, 0.0
    %v648 = vmax.f32 %v639, 0.0
    %650 = vset.pattern.permute.xlu0 0
    %651 = vperm.xlu0 %650, %v41
    %v652 = vpop.permute.xlu0 %651
    %655 = vset.pattern.permute.xlu0 0
    %656 = vperm.xlu0 %655, %v42
    %v657 = vpop.permute.xlu0 %656
    %v660 = vsel %vm124, %v29, 0
    %v663 = vsel %vm124, %v30, 0
    %665 = vmatprep.subr.mxu0 %v642
    %666 = vmatpush1.msra.mxu0 %v641
    %667 = vmatprep.subr.mxu0 %v646
    %668 = vmatpush1.msra.mxu0 %v645
    %669 = vmatprep.subr.mxu0 0.0
    %670 = vmatpush1.msra.mxu0 0.0
    %671 = vmatprep.subr.mxu0 0.0
    %672 = vmatpush1.msra.mxu0 0.0
    %673 = vmatprep.subr.mxu0 0.0
    %674 = vmatpush1.msra.mxu0 0.0
    %675 = vmatprep.subr.mxu0 0.0
    %676 = vmatpush1.msra.mxu0 0.0
    %677 = vmatprep.subr.mxu0 0.0
    %678 = vmatpush1.msra.mxu0 0.0
    %679 = vmatprep.subr.mxu0 0.0
    %680 = vmatpush1.msra.mxu0 0.0
    %681 = vmatprep.subr.mxu0 0.0
    %682 = vmatpush1.msra.mxu0 0.0
    %683 = vmatprep.subr.mxu0 0.0
    %684 = vmatpush1.msra.mxu0 0.0
    %685 = vmatprep.subr.mxu0 0.0
    %686 = vmatpush1.msra.mxu0 0.0
    %687 = vmatprep.subr.mxu0 0.0
    %688 = vmatpush1.msra.mxu0 0.0
    %689 = vmatprep.subr.mxu0 0.0
    %690 = vmatpush1.msra.mxu0 0.0
    %691 = vmatprep.subr.mxu0 0.0
    %692 = vmatpush1.msra.mxu0 0.0
    %693 = vmatprep.subr.mxu0 0.0
    %694 = vmatpush1.msra.mxu0 0.0
    %695 = vmatprep.subr.mxu0 0.0
    %696 = vmatpush1.msra.mxu0 0.0
    %697 = vmatprep.subr.mxu0 0.0
    %698 = vmatpush1.msra.mxu0 0.0
    %699 = vmatprep.subr.mxu0 0.0
    %700 = vmatpush1.msra.mxu0 0.0
    %701 = vmatprep.subr.mxu0 0.0
    %702 = vmatpush1.msra.mxu0 0.0
    %703 = vmatprep.subr.mxu0 0.0
    %704 = vmatpush1.msra.mxu0 0.0
    %705 = vmatprep.subr.mxu0 0.0
    %706 = vmatpush1.msra.mxu0 0.0
    %707 = vmatprep.subr.mxu0 0.0
    %708 = vmatpush1.msra.mxu0 0.0
    %709 = vmatprep.subr.mxu0 0.0
    %710 = vmatpush1.msra.mxu0 0.0
    %711 = vmatprep.subr.mxu0 0.0
    %712 = vmatpush1.msra.mxu0 0.0
    %713 = vmatprep.subr.mxu0 0.0
    %714 = vmatpush1.msra.mxu0 0.0
    %715 = vmatprep.subr.mxu0 0.0
    %716 = vmatpush1.msra.mxu0 0.0
    %717 = vmatprep.subr.mxu0 0.0
    %718 = vmatpush1.msra.mxu0 0.0
    %719 = vmatprep.subr.mxu0 0.0
    %720 = vmatpush1.msra.mxu0 0.0
    %721 = vmatprep.subr.mxu0 0.0
    %722 = vmatpush1.msra.mxu0 0.0
    %723 = vmatprep.subr.mxu0 0.0
    %724 = vmatpush1.msra.mxu0 0.0
    %725 = vmatprep.subr.mxu0 0.0
    %726 = vmatpush1.msra.mxu0 0.0
    %727 = vmatprep.subr.mxu0 0.0
    %728 = vmatpush1.msra.mxu0 0.0
    %729 = vmatprep.mubr.f32.mxu0 0.0
    %730 = vmatmul.mubr.f32.gmra.mrb[0].mxu0 %v660
    %v731 = vpop.f32.mrb[0].mxu0
    %v732 = vadd.f32 %v652, %v731
    %v733 = vpop.f32.mrb[0].mxu0
    %v734 = vadd.f32 %v652, %v733
    %735 = vmatprep.mubr.f32.mxu0 0.0
    %736 = vmatmul.mubr.f32.gmra.mrb[0].mxu0 %v663
    %v737 = vpop.f32.mrb[0].mxu0
    %v738 = vadd.f32 %v657, %v737
    %v739 = vpop.f32.mrb[0].mxu0
    %v740 = vadd.f32 %v657, %v739
    %741 = vdwg.mxu0
    %742 = vmatprep.subr.mxu0 %v644
    %743 = vmatpush1.msra.mxu0 %v643
    %744 = vmatprep.subr.mxu0 %v648
    %745 = vmatpush1.msra.mxu0 %v647
    %746 = vmatprep.subr.mxu0 0.0
    %747 = vmatpush1.msra.mxu0 0.0
    %748 = vmatprep.subr.mxu0 0.0
    %749 = vmatpush1.msra.mxu0 0.0
    %750 = vmatprep.subr.mxu0 0.0
    %751 = vmatpush1.msra.mxu0 0.0
    %752 = vmatprep.subr.mxu0 0.0
    %753 = vmatpush1.msra.mxu0 0.0
    %754 = vmatprep.subr.mxu0 0.0
    %755 = vmatpush1.msra.mxu0 0.0
    %756 = vmatprep.subr.mxu0 0.0
    %757 = vmatpush1.msra.mxu0 0.0
    %758 = vmatprep.subr.mxu0 0.0
    %759 = vmatpush1.msra.mxu0 0.0
    %760 = vmatprep.subr.mxu0 0.0
    %761 = vmatpush1.msra.mxu0 0.0
    %762 = vmatprep.subr.mxu0 0.0
    %763 = vmatpush1.msra.mxu0 0.0
    %764 = vmatprep.subr.mxu0 0.0
    %765 = vmatpush1.msra.mxu0 0.0
    %766 = vmatprep.subr.mxu0 0.0
    %767 = vmatpush1.msra.mxu0 0.0
    %768 = vmatprep.subr.mxu0 0.0
    %769 = vmatpush1.msra.mxu0 0.0
    %770 = vmatprep.subr.mxu0 0.0
    %771 = vmatpush1.msra.mxu0 0.0
    %772 = vmatprep.subr.mxu0 0.0
    %773 = vmatpush1.msra.mxu0 0.0
    %774 = vmatprep.subr.mxu0 0.0
    %775 = vmatpush1.msra.mxu0 0.0
    %776 = vmatprep.subr.mxu0 0.0
    %777 = vmatpush1.msra.mxu0 0.0
    %778 = vmatprep.subr.mxu0 0.0
    %779 = vmatpush1.msra.mxu0 0.0
    %780 = vmatprep.subr.mxu0 0.0
    %781 = vmatpush1.msra.mxu0 0.0
    %782 = vmatprep.subr.mxu0 0.0
    %783 = vmatpush1.msra.mxu0 0.0
    %784 = vmatprep.subr.mxu0 0.0
    %785 = vmatpush1.msra.mxu0 0.0
    %786 = vmatprep.subr.mxu0 0.0
    %787 = vmatpush1.msra.mxu0 0.0
    %788 = vmatprep.subr.mxu0 0.0
    %789 = vmatpush1.msra.mxu0 0.0
    %790 = vmatprep.subr.mxu0 0.0
    %791 = vmatpush1.msra.mxu0 0.0
    %792 = vmatprep.subr.mxu0 0.0
    %793 = vmatpush1.msra.mxu0 0.0
    %794 = vmatprep.subr.mxu0 0.0
    %795 = vmatpush1.msra.mxu0 0.0
    %796 = vmatprep.subr.mxu0 0.0
    %797 = vmatpush1.msra.mxu0 0.0
    %798 = vmatprep.subr.mxu0 0.0
    %799 = vmatpush1.msra.mxu0 0.0
    %800 = vmatprep.subr.mxu0 0.0
    %801 = vmatpush1.msra.mxu0 0.0
    %802 = vmatprep.subr.mxu0 0.0
    %803 = vmatpush1.msra.mxu0 0.0
    %804 = vmatprep.subr.mxu0 0.0
    %805 = vmatpush1.msra.mxu0 0.0
    %806 = vmatprep.mubr.f32.mxu0 0.0
    %807 = vmatmul.mubr.f32.gmra.mrb[0].mxu0 %v660
    %v808 = vpop.f32.mrb[0].mxu0
    %v809 = vadd.f32 %v652, %v808
    %v810 = vpop.f32.mrb[0].mxu0
    %v811 = vadd.f32 %v652, %v810
    %812 = vmatprep.mubr.f32.mxu0 0.0
    %813 = vmatmul.mubr.f32.gmra.mrb[0].mxu0 %v663
    %v814 = vpop.f32.mrb[0].mxu0
    %v815 = vadd.f32 %v657, %v814
    %v816 = vpop.f32.mrb[0].mxu0
    %v817 = vadd.f32 %v657, %v816
    %818 = vdwg.mxu0
    %v819 = vmax.f32 %v732, 0.0
    %v820 = vmax.f32 %v734, 0.0
    %v821 = vmax.f32 %v809, 0.0
    %v822 = vmax.f32 %v811, 0.0
    %v823 = vmax.f32 %v738, 0.0
    %v824 = vmax.f32 %v740, 0.0
    %v825 = vmax.f32 %v815, 0.0
    %v826 = vmax.f32 %v817, 0.0
    %828 = vset.pattern.permute.xlu0 0
    %829 = vperm.xlu0 %828, %v44
    %v830 = vpop.permute.xlu0 %829
    %833 = vset.pattern.permute.xlu0 0
    %834 = vperm.xlu0 %833, %v45
    %v835 = vpop.permute.xlu0 %834
    %v837 = vmul.f32 %v830, %v819
    %v838 = vmul.f32 %v830, %v820
    %v839 = vmul.f32 %v830, %v821
    %v840 = vmul.f32 %v830, %v822
    %v841 = vmul.f32 %v835, %v823
    %v842 = vmul.f32 %v835, %v824
    %v843 = vmul.f32 %v835, %v825
    %v844 = vmul.f32 %v835, %v826
    %v845 = vadd.f32 %v837, %v841
    %v846 = vrot.slane %v845, 4
    %v847 = vadd.f32 %v845, %v846
    %v848 = vrot.slane %v847, 2
    %v849 = vadd.f32 %v847, %v848
    %v850 = vrot.slane %v849, 1
    %v851 = vadd.f32 %v849, %v850
    %v852 = vadd.f32 %v838, %v842
    %v853 = vrot.slane %v852, 4
    %v854 = vadd.f32 %v852, %v853
    %v855 = vrot.slane %v854, 2
    %v856 = vadd.f32 %v854, %v855
    %v857 = vrot.slane %v856, 1
    %v858 = vadd.f32 %v856, %v857
    %v859 = vadd.f32 %v839, %v843
    %v860 = vrot.slane %v859, 4
    %v861 = vadd.f32 %v859, %v860
    %v862 = vrot.slane %v861, 2
    %v863 = vadd.f32 %v861, %v862
    %v864 = vrot.slane %v863, 1
    %v865 = vadd.f32 %v863, %v864
    %v866 = vadd.f32 %v840, %v844
    %v867 = vrot.slane %v866, 4
    %v868 = vadd.f32 %v866, %v867
    %v869 = vrot.slane %v868, 2
    %v870 = vadd.f32 %v868, %v869
    %v871 = vrot.slane %v870, 1
    %v872 = vadd.f32 %v870, %v871
    %874 = vset.pattern.permute.xlu0 0
    %875 = vperm.xlu0 %874, %v47
    %v876 = vpop.permute.xlu0 %875
    %v878 = vadd.f32 %v851, %v876
    %v879 = vadd.f32 %v858, %v876
    %v880 = vadd.f32 %v865, %v876
    %v881 = vadd.f32 %v872, %v876
    %v886 = vcombine.low %v878, %v879
    %v887 = vcombine.low %v880, %v881
    %v889 = vunpack.c.l.s4 1966171168
    %v890 = vunpack.c.0.s8 %v889
    %v891 = vlaneseq
    %v892 = vshrl.u32 %v891, 7
    %v893 = vsub.s32 %v890, %v892
    %v894 = vrot.slane %v886, %v893
    %v896 = vunpack.c.l.s4 1966171168
    %v897 = vunpack.c.0.s8 %v896
    %v898 = vlaneseq
    %v899 = vshrl.u32 %v898, 7
    %v900 = vsub.s32 %v897, %v899
    %v901 = vrot.slane %v887, %v900
    %v902 = vcombine.low %v894, %v901
    %v904 = vunpack.c.l.s4 1966171168
    %v905 = vunpack.c.0.s8 %v904
    %v906 = vlaneseq
    %v907 = vshrl.u32 %v906, 7
    %v908 = vsub.s32 %v905, %v907
    %v909 = vrot.slane %v902, %v908
    %v911 = vlaneseq
    %vm912 = vcmp.ge.s32.totalorder %v911, 0
    %vm913 = vcmp.lt.s32.totalorder %v911, 512
    %vm914 = vmand %vm912, %vm913
    %915 = vst.msk [vmem:[#allocation2] ss:$2 sm:$0xf] %vm914, %v909
    %s916 = scalar_lea.vmem %s0, 1
    %v917 = vld [vmem:[%s916] ss:$2 sm:$0xf]
    %v919 = vlaneseq
    %v920 = vshrl.u32 %v919, 7
    %v921 = vsub.s32 0, %v920
    %v922 = vrot.slane %v917, %v921
    %v923 = vlaneseq
    %v924 = vshrl.u32 %v923, 7
    %v925 = vsub.s32 1, %v924
    %v926 = vrot.slane %v917, %v925
    %v927 = vlaneseq
    %v928 = vshrl.u32 %v927, 7
    %v929 = vsub.s32 2, %v928
    %v930 = vrot.slane %v917, %v929
    %v931 = vlaneseq
    %v932 = vshrl.u32 %v931, 7
    %v933 = vsub.s32 3, %v932
    %v934 = vrot.slane %v917, %v933
    %v939 = vmul.f32 %v52, %v922
    %v940 = vmul.f32 %v52, %v926
    %v941 = vmul.f32 %v52, %v930
    %v942 = vmul.f32 %v52, %v934
    %v943 = vmul.f32 %v57, %v922
    %v944 = vmul.f32 %v57, %v926
    %v945 = vmul.f32 %v57, %v930
    %v946 = vmul.f32 %v57, %v934
    %v947 = vadd.f32 %v939, %v91
    %v948 = vadd.f32 %v940, %v91
    %v949 = vadd.f32 %v941, %v91
    %v950 = vadd.f32 %v942, %v91
    %v951 = vadd.f32 %v943, %v96
    %v952 = vadd.f32 %v944, %v96
    %v953 = vadd.f32 %v945, %v96
    %v954 = vadd.f32 %v946, %v96
    %v955 = vmax.f32 %v947, 0.0
    %v956 = vmax.f32 %v948, 0.0
    %v957 = vmax.f32 %v949, 0.0
    %v958 = vmax.f32 %v950, 0.0
    %v959 = vmax.f32 %v951, 0.0
    %v960 = vmax.f32 %v952, 0.0
    %v961 = vmax.f32 %v953, 0.0
    %v962 = vmax.f32 %v954, 0.0
    %963 = vmatprep.subr.mxu0 %v956
    %964 = vmatpush1.msra.mxu0 %v955
    %965 = vmatprep.subr.mxu0 %v960
    %966 = vmatpush1.msra.mxu0 %v959
    %967 = vmatprep.subr.mxu0 0.0
    %968 = vmatpush1.msra.mxu0 0.0
    %969 = vmatprep.subr.mxu0 0.0
    %970 = vmatpush1.msra.mxu0 0.0
    %971 = vmatprep.subr.mxu0 0.0
    %972 = vmatpush1.msra.mxu0 0.0
    %973 = vmatprep.subr.mxu0 0.0
    %974 = vmatpush1.msra.mxu0 0.0
    %975 = vmatprep.subr.mxu0 0.0
    %976 = vmatpush1.msra.mxu0 0.0
    %977 = vmatprep.subr.mxu0 0.0
    %978 = vmatpush1.msra.mxu0 0.0
    %979 = vmatprep.subr.mxu0 0.0
    %980 = vmatpush1.msra.mxu0 0.0
    %981 = vmatprep.subr.mxu0 0.0
    %982 = vmatpush1.msra.mxu0 0.0
    %983 = vmatprep.subr.mxu0 0.0
    %984 = vmatpush1.msra.mxu0 0.0
    %985 = vmatprep.subr.mxu0 0.0
    %986 = vmatpush1.msra.mxu0 0.0
    %987 = vmatprep.subr.mxu0 0.0
    %988 = vmatpush1.msra.mxu0 0.0
    %989 = vmatprep.subr.mxu0 0.0
    %990 = vmatpush1.msra.mxu0 0.0
    %991 = vmatprep.subr.mxu0 0.0
    %992 = vmatpush1.msra.mxu0 0.0
    %993 = vmatprep.subr.mxu0 0.0
    %994 = vmatpush1.msra.mxu0 0.0
    %995 = vmatprep.subr.mxu0 0.0
    %996 = vmatpush1.msra.mxu0 0.0
    %997 = vmatprep.subr.mxu0 0.0
    %998 = vmatpush1.msra.mxu0 0.0
    %999 = vmatprep.subr.mxu0 0.0
    %1000 = vmatpush1.msra.mxu0 0.0
    %1001 = vmatprep.subr.mxu0 0.0
    %1002 = vmatpush1.msra.mxu0 0.0
    %1003 = vmatprep.subr.mxu0 0.0
    %1004 = vmatpush1.msra.mxu0 0.0
    %1005 = vmatprep.subr.mxu0 0.0
    %1006 = vmatpush1.msra.mxu0 0.0
    %1007 = vmatprep.subr.mxu0 0.0
    %1008 = vmatpush1.msra.mxu0 0.0
    %1009 = vmatprep.subr.mxu0 0.0
    %1010 = vmatpush1.msra.mxu0 0.0
    %1011 = vmatprep.subr.mxu0 0.0
    %1012 = vmatpush1.msra.mxu0 0.0
    %1013 = vmatprep.subr.mxu0 0.0
    %1014 = vmatpush1.msra.mxu0 0.0
    %1015 = vmatprep.subr.mxu0 0.0
    %1016 = vmatpush1.msra.mxu0 0.0
    %1017 = vmatprep.subr.mxu0 0.0
    %1018 = vmatpush1.msra.mxu0 0.0
    %1019 = vmatprep.subr.mxu0 0.0
    %1020 = vmatpush1.msra.mxu0 0.0
    %1021 = vmatprep.subr.mxu0 0.0
    %1022 = vmatpush1.msra.mxu0 0.0
    %1023 = vmatprep.subr.mxu0 0.0
    %1024 = vmatpush1.msra.mxu0 0.0
    %1025 = vmatprep.subr.mxu0 0.0
    %1026 = vmatpush1.msra.mxu0 0.0
    %1027 = vmatprep.mubr.f32.mxu0 0.0
    %1028 = vmatmul.mubr.f32.gmra.mrb[0].mxu0 %v126
    %v1029 = vpop.f32.mrb[0].mxu0
    %v1030 = vadd.f32 %v117, %v1029
    %v1031 = vpop.f32.mrb[0].mxu0
    %v1032 = vadd.f32 %v117, %v1031
    %1033 = vmatprep.mubr.f32.mxu0 0.0
    %1034 = vmatmul.mubr.f32.gmra.mrb[0].mxu0 %v129
    %v1035 = vpop.f32.mrb[0].mxu0
    %v1036 = vadd.f32 %v122, %v1035
    %v1037 = vpop.f32.mrb[0].mxu0
    %v1038 = vadd.f32 %v122, %v1037
    %1039 = vdwg.mxu0
    %1040 = vmatprep.subr.mxu0 %v958
    %1041 = vmatpush1.msra.mxu0 %v957
    %1042 = vmatprep.subr.mxu0 %v962
    %1043 = vmatpush1.msra.mxu0 %v961
    %1044 = vmatprep.subr.mxu0 0.0
    %1045 = vmatpush1.msra.mxu0 0.0
    %1046 = vmatprep.subr.mxu0 0.0
    %1047 = vmatpush1.msra.mxu0 0.0
    %1048 = vmatprep.subr.mxu0 0.0
    %1049 = vmatpush1.msra.mxu0 0.0
    %1050 = vmatprep.subr.mxu0 0.0
    %1051 = vmatpush1.msra.mxu0 0.0
    %1052 = vmatprep.subr.mxu0 0.0
    %1053 = vmatpush1.msra.mxu0 0.0
    %1054 = vmatprep.subr.mxu0 0.0
    %1055 = vmatpush1.msra.mxu0 0.0
    %1056 = vmatprep.subr.mxu0 0.0
    %1057 = vmatpush1.msra.mxu0 0.0
    %1058 = vmatprep.subr.mxu0 0.0
    %1059 = vmatpush1.msra.mxu0 0.0
    %1060 = vmatprep.subr.mxu0 0.0
    %1061 = vmatpush1.msra.mxu0 0.0
    %1062 = vmatprep.subr.mxu0 0.0
    %1063 = vmatpush1.msra.mxu0 0.0
    %1064 = vmatprep.subr.mxu0 0.0
    %1065 = vmatpush1.msra.mxu0 0.0
    %1066 = vmatprep.subr.mxu0 0.0
    %1067 = vmatpush1.msra.mxu0 0.0
    %1068 = vmatprep.subr.mxu0 0.0
    %1069 = vmatpush1.msra.mxu0 0.0
    %1070 = vmatprep.subr.mxu0 0.0
    %1071 = vmatpush1.msra.mxu0 0.0
    %1072 = vmatprep.subr.mxu0 0.0
    %1073 = vmatpush1.msra.mxu0 0.0
    %1074 = vmatprep.subr.mxu0 0.0
    %1075 = vmatpush1.msra.mxu0 0.0
    %1076 = vmatprep.subr.mxu0 0.0
    %1077 = vmatpush1.msra.mxu0 0.0
    %1078 = vmatprep.subr.mxu0 0.0
    %1079 = vmatpush1.msra.mxu0 0.0
    %1080 = vmatprep.subr.mxu0 0.0
    %1081 = vmatpush1.msra.mxu0 0.0
    %1082 = vmatprep.subr.mxu0 0.0
    %1083 = vmatpush1.msra.mxu0 0.0
    %1084 = vmatprep.subr.mxu0 0.0
    %1085 = vmatpush1.msra.mxu0 0.0
    %1086 = vmatprep.subr.mxu0 0.0
    %1087 = vmatpush1.msra.mxu0 0.0
    %1088 = vmatprep.subr.mxu0 0.0
    %1089 = vmatpush1.msra.mxu0 0.0
    %1090 = vmatprep.subr.mxu0 0.0
    %1091 = vmatpush1.msra.mxu0 0.0
    %1092 = vmatprep.subr.mxu0 0.0
    %1093 = vmatpush1.msra.mxu0 0.0
    %1094 = vmatprep.subr.mxu0 0.0
    %1095 = vmatpush1.msra.mxu0 0.0
    %1096 = vmatprep.subr.mxu0 0.0
    %1097 = vmatpush1.msra.mxu0 0.0
    %1098 = vmatprep.subr.mxu0 0.0
    %1099 = vmatpush1.msra.mxu0 0.0
    %1100 = vmatprep.subr.mxu0 0.0
    %1101 = vmatpush1.msra.mxu0 0.0
    %1102 = vmatprep.subr.mxu0 0.0
    %1103 = vmatpush1.msra.mxu0 0.0
    %1104 = vmatprep.mubr.f32.mxu0 0.0
    %1105 = vmatmul.mubr.f32.gmra.mrb[0].mxu0 %v126
    %v1106 = vpop.f32.mrb[0].mxu0
    %v1107 = vadd.f32 %v117, %v1106
    %v1108 = vpop.f32.mrb[0].mxu0
    %v1109 = vadd.f32 %v117, %v1108
    %1110 = vmatprep.mubr.f32.mxu0 0.0
    %1111 = vmatmul.mubr.f32.gmra.mrb[0].mxu0 %v129
    %v1112 = vpop.f32.mrb[0].mxu0
    %v1113 = vadd.f32 %v122, %v1112
    %v1114 = vpop.f32.mrb[0].mxu0
    %v1115 = vadd.f32 %v122, %v1114
    %1116 = vdwg.mxu0
    %v1117 = vmax.f32 %v1030, 0.0
    %v1118 = vmax.f32 %v1032, 0.0
    %v1119 = vmax.f32 %v1107, 0.0
    %v1120 = vmax.f32 %v1109, 0.0
    %v1121 = vmax.f32 %v1036, 0.0
    %v1122 = vmax.f32 %v1038, 0.0
    %v1123 = vmax.f32 %v1113, 0.0
    %v1124 = vmax.f32 %v1115, 0.0
    %1125 = vmatprep.subr.mxu0 %v1118
    %1126 = vmatpush1.msra.mxu0 %v1117
    %1127 = vmatprep.subr.mxu0 %v1122
    %1128 = vmatpush1.msra.mxu0 %v1121
    %1129 = vmatprep.subr.mxu0 0.0
    %1130 = vmatpush1.msra.mxu0 0.0
    %1131 = vmatprep.subr.mxu0 0.0
    %1132 = vmatpush1.msra.mxu0 0.0
    %1133 = vmatprep.subr.mxu0 0.0
    %1134 = vmatpush1.msra.mxu0 0.0
    %1135 = vmatprep.subr.mxu0 0.0
    %1136 = vmatpush1.msra.mxu0 0.0
    %1137 = vmatprep.subr.mxu0 0.0
    %1138 = vmatpush1.msra.mxu0 0.0
    %1139 = vmatprep.subr.mxu0 0.0
    %1140 = vmatpush1.msra.mxu0 0.0
    %1141 = vmatprep.subr.mxu0 0.0
    %1142 = vmatpush1.msra.mxu0 0.0
    %1143 = vmatprep.subr.mxu0 0.0
    %1144 = vmatpush1.msra.mxu0 0.0
    %1145 = vmatprep.subr.mxu0 0.0
    %1146 = vmatpush1.msra.mxu0 0.0
    %1147 = vmatprep.subr.mxu0 0.0
    %1148 = vmatpush1.msra.mxu0 0.0
    %1149 = vmatprep.subr.mxu0 0.0
    %1150 = vmatpush1.msra.mxu0 0.0
    %1151 = vmatprep.subr.mxu0 0.0
    %1152 = vmatpush1.msra.mxu0 0.0
    %1153 = vmatprep.subr.mxu0 0.0
    %1154 = vmatpush1.msra.mxu0 0.0
    %1155 = vmatprep.subr.mxu0 0.0
    %1156 = vmatpush1.msra.mxu0 0.0
    %1157 = vmatprep.subr.mxu0 0.0
    %1158 = vmatpush1.msra.mxu0 0.0
    %1159 = vmatprep.subr.mxu0 0.0
    %1160 = vmatpush1.msra.mxu0 0.0
    %1161 = vmatprep.subr.mxu0 0.0
    %1162 = vmatpush1.msra.mxu0 0.0
    %1163 = vmatprep.subr.mxu0 0.0
    %1164 = vmatpush1.msra.mxu0 0.0
    %1165 = vmatprep.subr.mxu0 0.0
    %1166 = vmatpush1.msra.mxu0 0.0
    %1167 = vmatprep.subr.mxu0 0.0
    %1168 = vmatpush1.msra.mxu0 0.0
    %1169 = vmatprep.subr.mxu0 0.0
    %1170 = vmatpush1.msra.mxu0 0.0
    %1171 = vmatprep.subr.mxu0 0.0
    %1172 = vmatpush1.msra.mxu0 0.0
    %1173 = vmatprep.subr.mxu0 0.0
    %1174 = vmatpush1.msra.mxu0 0.0
    %1175 = vmatprep.subr.mxu0 0.0
    %1176 = vmatpush1.msra.mxu0 0.0
    %1177 = vmatprep.subr.mxu0 0.0
    %1178 = vmatpush1.msra.mxu0 0.0
    %1179 = vmatprep.subr.mxu0 0.0
    %1180 = vmatpush1.msra.mxu0 0.0
    %1181 = vmatprep.subr.mxu0 0.0
    %1182 = vmatpush1.msra.mxu0 0.0
    %1183 = vmatprep.subr.mxu0 0.0
    %1184 = vmatpush1.msra.mxu0 0.0
    %1185 = vmatprep.subr.mxu0 0.0
    %1186 = vmatpush1.msra.mxu0 0.0
    %1187 = vmatprep.subr.mxu0 0.0
    %1188 = vmatpush1.msra.mxu0 0.0
    %1189 = vmatprep.mubr.f32.mxu0 0.0
    %1190 = vmatmul.mubr.f32.gmra.mrb[0].mxu0 %v304
    %v1191 = vpop.f32.mrb[0].mxu0
    %v1192 = vadd.f32 %v296, %v1191
    %v1193 = vpop.f32.mrb[0].mxu0
    %v1194 = vadd.f32 %v296, %v1193
    %1195 = vmatprep.mubr.f32.mxu0 0.0
    %1196 = vmatmul.mubr.f32.gmra.mrb[0].mxu0 %v307
    %v1197 = vpop.f32.mrb[0].mxu0
    %v1198 = vadd.f32 %v301, %v1197
    %v1199 = vpop.f32.mrb[0].mxu0
    %v1200 = vadd.f32 %v301, %v1199
    %1201 = vdwg.mxu0
    %1202 = vmatprep.subr.mxu0 %v1120
    %1203 = vmatpush1.msra.mxu0 %v1119
    %1204 = vmatprep.subr.mxu0 %v1124
    %1205 = vmatpush1.msra.mxu0 %v1123
    %1206 = vmatprep.subr.mxu0 0.0
    %1207 = vmatpush1.msra.mxu0 0.0
    %1208 = vmatprep.subr.mxu0 0.0
    %1209 = vmatpush1.msra.mxu0 0.0
    %1210 = vmatprep.subr.mxu0 0.0
    %1211 = vmatpush1.msra.mxu0 0.0
    %1212 = vmatprep.subr.mxu0 0.0
    %1213 = vmatpush1.msra.mxu0 0.0
    %1214 = vmatprep.subr.mxu0 0.0
    %1215 = vmatpush1.msra.mxu0 0.0
    %1216 = vmatprep.subr.mxu0 0.0
    %1217 = vmatpush1.msra.mxu0 0.0
    %1218 = vmatprep.subr.mxu0 0.0
    %1219 = vmatpush1.msra.mxu0 0.0
    %1220 = vmatprep.subr.mxu0 0.0
    %1221 = vmatpush1.msra.mxu0 0.0
    %1222 = vmatprep.subr.mxu0 0.0
    %1223 = vmatpush1.msra.mxu0 0.0
    %1224 = vmatprep.subr.mxu0 0.0
    %1225 = vmatpush1.msra.mxu0 0.0
    %1226 = vmatprep.subr.mxu0 0.0
    %1227 = vmatpush1.msra.mxu0 0.0
    %1228 = vmatprep.subr.mxu0 0.0
    %1229 = vmatpush1.msra.mxu0 0.0
    %1230 = vmatprep.subr.mxu0 0.0
    %1231 = vmatpush1.msra.mxu0 0.0
    %1232 = vmatprep.subr.mxu0 0.0
    %1233 = vmatpush1.msra.mxu0 0.0
    %1234 = vmatprep.subr.mxu0 0.0
    %1235 = vmatpush1.msra.mxu0 0.0
    %1236 = vmatprep.subr.mxu0 0.0
    %1237 = vmatpush1.msra.mxu0 0.0
    %1238 = vmatprep.subr.mxu0 0.0
    %1239 = vmatpush1.msra.mxu0 0.0
    %1240 = vmatprep.subr.mxu0 0.0
    %1241 = vmatpush1.msra.mxu0 0.0
    %1242 = vmatprep.subr.mxu0 0.0
    %1243 = vmatpush1.msra.mxu0 0.0
    %1244 = vmatprep.subr.mxu0 0.0
    %1245 = vmatpush1.msra.mxu0 0.0
    %1246 = vmatprep.subr.mxu0 0.0
    %1247 = vmatpush1.msra.mxu0 0.0
    %1248 = vmatprep.subr.mxu0 0.0
    %1249 = vmatpush1.msra.mxu0 0.0
    %1250 = vmatprep.subr.mxu0 0.0
    %1251 = vmatpush1.msra.mxu0 0.0
    %1252 = vmatprep.subr.mxu0 0.0
    %1253 = vmatpush1.msra.mxu0 0.0
    %1254 = vmatprep.subr.mxu0 0.0
    %1255 = vmatpush1.msra.mxu0 0.0
    %1256 = vmatprep.subr.mxu0 0.0
    %1257 = vmatpush1.msra.mxu0 0.0
    %1258 = vmatprep.subr.mxu0 0.0
    %1259 = vmatpush1.msra.mxu0 0.0
    %1260 = vmatprep.subr.mxu0 0.0
    %1261 = vmatpush1.msra.mxu0 0.0
    %1262 = vmatprep.subr.mxu0 0.0
    %1263 = vmatpush1.msra.mxu0 0.0
    %1264 = vmatprep.subr.mxu0 0.0
    %1265 = vmatpush1.msra.mxu0 0.0
    %1266 = vmatprep.mubr.f32.mxu0 0.0
    %1267 = vmatmul.mubr.f32.gmra.mrb[0].mxu0 %v304
    %v1268 = vpop.f32.mrb[0].mxu0
    %v1269 = vadd.f32 %v296, %v1268
    %v1270 = vpop.f32.mrb[0].mxu0
    %v1271 = vadd.f32 %v296, %v1270
    %1272 = vmatprep.mubr.f32.mxu0 0.0
    %1273 = vmatmul.mubr.f32.gmra.mrb[0].mxu0 %v307
    %v1274 = vpop.f32.mrb[0].mxu0
    %v1275 = vadd.f32 %v301, %v1274
    %v1276 = vpop.f32.mrb[0].mxu0
    %v1277 = vadd.f32 %v301, %v1276
    %1278 = vdwg.mxu0
    %v1279 = vmax.f32 %v1192, 0.0
    %v1280 = vmax.f32 %v1194, 0.0
    %v1281 = vmax.f32 %v1269, 0.0
    %v1282 = vmax.f32 %v1271, 0.0
    %v1283 = vmax.f32 %v1198, 0.0
    %v1284 = vmax.f32 %v1200, 0.0
    %v1285 = vmax.f32 %v1275, 0.0
    %v1286 = vmax.f32 %v1277, 0.0
    %1287 = vmatprep.subr.mxu0 %v1280
    %1288 = vmatpush1.msra.mxu0 %v1279
    %1289 = vmatprep.subr.mxu0 %v1284
    %1290 = vmatpush1.msra.mxu0 %v1283
    %1291 = vmatprep.subr.mxu0 0.0
    %1292 = vmatpush1.msra.mxu0 0.0
    %1293 = vmatprep.subr.mxu0 0.0
    %1294 = vmatpush1.msra.mxu0 0.0
    %1295 = vmatprep.subr.mxu0 0.0
    %1296 = vmatpush1.msra.mxu0 0.0
    %1297 = vmatprep.subr.mxu0 0.0
    %1298 = vmatpush1.msra.mxu0 0.0
    %1299 = vmatprep.subr.mxu0 0.0
    %1300 = vmatpush1.msra.mxu0 0.0
    %1301 = vmatprep.subr.mxu0 0.0
    %1302 = vmatpush1.msra.mxu0 0.0
    %1303 = vmatprep.subr.mxu0 0.0
    %1304 = vmatpush1.msra.mxu0 0.0
    %1305 = vmatprep.subr.mxu0 0.0
    %1306 = vmatpush1.msra.mxu0 0.0
    %1307 = vmatprep.subr.mxu0 0.0
    %1308 = vmatpush1.msra.mxu0 0.0
    %1309 = vmatprep.subr.mxu0 0.0
    %1310 = vmatpush1.msra.mxu0 0.0
    %1311 = vmatprep.subr.mxu0 0.0
    %1312 = vmatpush1.msra.mxu0 0.0
    %1313 = vmatprep.subr.mxu0 0.0
    %1314 = vmatpush1.msra.mxu0 0.0
    %1315 = vmatprep.subr.mxu0 0.0
    %1316 = vmatpush1.msra.mxu0 0.0
    %1317 = vmatprep.subr.mxu0 0.0
    %1318 = vmatpush1.msra.mxu0 0.0
    %1319 = vmatprep.subr.mxu0 0.0
    %1320 = vmatpush1.msra.mxu0 0.0
    %1321 = vmatprep.subr.mxu0 0.0
    %1322 = vmatpush1.msra.mxu0 0.0
    %1323 = vmatprep.subr.mxu0 0.0
    %1324 = vmatpush1.msra.mxu0 0.0
    %1325 = vmatprep.subr.mxu0 0.0
    %1326 = vmatpush1.msra.mxu0 0.0
    %1327 = vmatprep.subr.mxu0 0.0
    %1328 = vmatpush1.msra.mxu0 0.0
    %1329 = vmatprep.subr.mxu0 0.0
    %1330 = vmatpush1.msra.mxu0 0.0
    %1331 = vmatprep.subr.mxu0 0.0
    %1332 = vmatpush1.msra.mxu0 0.0
    %1333 = vmatprep.subr.mxu0 0.0
    %1334 = vmatpush1.msra.mxu0 0.0
    %1335 = vmatprep.subr.mxu0 0.0
    %1336 = vmatpush1.msra.mxu0 0.0
    %1337 = vmatprep.subr.mxu0 0.0
    %1338 = vmatpush1.msra.mxu0 0.0
    %1339 = vmatprep.subr.mxu0 0.0
    %1340 = vmatpush1.msra.mxu0 0.0
    %1341 = vmatprep.subr.mxu0 0.0
    %1342 = vmatpush1.msra.mxu0 0.0
    %1343 = vmatprep.subr.mxu0 0.0
    %1344 = vmatpush1.msra.mxu0 0.0
    %1345 = vmatprep.subr.mxu0 0.0
    %1346 = vmatpush1.msra.mxu0 0.0
    %1347 = vmatprep.subr.mxu0 0.0
    %1348 = vmatpush1.msra.mxu0 0.0
    %1349 = vmatprep.subr.mxu0 0.0
    %1350 = vmatpush1.msra.mxu0 0.0
    %1351 = vmatprep.mubr.f32.mxu0 0.0
    %1352 = vmatmul.mubr.f32.gmra.mrb[0].mxu0 %v482
    %v1353 = vpop.f32.mrb[0].mxu0
    %v1354 = vadd.f32 %v474, %v1353
    %v1355 = vpop.f32.mrb[0].mxu0
    %v1356 = vadd.f32 %v474, %v1355
    %1357 = vmatprep.mubr.f32.mxu0 0.0
    %1358 = vmatmul.mubr.f32.gmra.mrb[0].mxu0 %v485
    %v1359 = vpop.f32.mrb[0].mxu0
    %v1360 = vadd.f32 %v479, %v1359
    %v1361 = vpop.f32.mrb[0].mxu0
    %v1362 = vadd.f32 %v479, %v1361
    %1363 = vdwg.mxu0
    %1364 = vmatprep.subr.mxu0 %v1282
    %1365 = vmatpush1.msra.mxu0 %v1281
    %1366 = vmatprep.subr.mxu0 %v1286
    %1367 = vmatpush1.msra.mxu0 %v1285
    %1368 = vmatprep.subr.mxu0 0.0
    %1369 = vmatpush1.msra.mxu0 0.0
    %1370 = vmatprep.subr.mxu0 0.0
    %1371 = vmatpush1.msra.mxu0 0.0
    %1372 = vmatprep.subr.mxu0 0.0
    %1373 = vmatpush1.msra.mxu0 0.0
    %1374 = vmatprep.subr.mxu0 0.0
    %1375 = vmatpush1.msra.mxu0 0.0
    %1376 = vmatprep.subr.mxu0 0.0
    %1377 = vmatpush1.msra.mxu0 0.0
    %1378 = vmatprep.subr.mxu0 0.0
    %1379 = vmatpush1.msra.mxu0 0.0
    %1380 = vmatprep.subr.mxu0 0.0
    %1381 = vmatpush1.msra.mxu0 0.0
    %1382 = vmatprep.subr.mxu0 0.0
    %1383 = vmatpush1.msra.mxu0 0.0
    %1384 = vmatprep.subr.mxu0 0.0
    %1385 = vmatpush1.msra.mxu0 0.0
    %1386 = vmatprep.subr.mxu0 0.0
    %1387 = vmatpush1.msra.mxu0 0.0
    %1388 = vmatprep.subr.mxu0 0.0
    %1389 = vmatpush1.msra.mxu0 0.0
    %1390 = vmatprep.subr.mxu0 0.0
    %1391 = vmatpush1.msra.mxu0 0.0
    %1392 = vmatprep.subr.mxu0 0.0
    %1393 = vmatpush1.msra.mxu0 0.0
    %1394 = vmatprep.subr.mxu0 0.0
    %1395 = vmatpush1.msra.mxu0 0.0
    %1396 = vmatprep.subr.mxu0 0.0
    %1397 = vmatpush1.msra.mxu0 0.0
    %1398 = vmatprep.subr.mxu0 0.0
    %1399 = vmatpush1.msra.mxu0 0.0
    %1400 = vmatprep.subr.mxu0 0.0
    %1401 = vmatpush1.msra.mxu0 0.0
    %1402 = vmatprep.subr.mxu0 0.0
    %1403 = vmatpush1.msra.mxu0 0.0
    %1404 = vmatprep.subr.mxu0 0.0
    %1405 = vmatpush1.msra.mxu0 0.0
    %1406 = vmatprep.subr.mxu0 0.0
    %1407 = vmatpush1.msra.mxu0 0.0
    %1408 = vmatprep.subr.mxu0 0.0
    %1409 = vmatpush1.msra.mxu0 0.0
    %1410 = vmatprep.subr.mxu0 0.0
    %1411 = vmatpush1.msra.mxu0 0.0
    %1412 = vmatprep.subr.mxu0 0.0
    %1413 = vmatpush1.msra.mxu0 0.0
    %1414 = vmatprep.subr.mxu0 0.0
    %1415 = vmatpush1.msra.mxu0 0.0
    %1416 = vmatprep.subr.mxu0 0.0
    %1417 = vmatpush1.msra.mxu0 0.0
    %1418 = vmatprep.subr.mxu0 0.0
    %1419 = vmatpush1.msra.mxu0 0.0
    %1420 = vmatprep.subr.mxu0 0.0
    %1421 = vmatpush1.msra.mxu0 0.0
    %1422 = vmatprep.subr.mxu0 0.0
    %1423 = vmatpush1.msra.mxu0 0.0
    %1424 = vmatprep.subr.mxu0 0.0
    %1425 = vmatpush1.msra.mxu0 0.0
    %1426 = vmatprep.subr.mxu0 0.0
    %1427 = vmatpush1.msra.mxu0 0.0
    %1428 = vmatprep.mubr.f32.mxu0 0.0
    %1429 = vmatmul.mubr.f32.gmra.mrb[0].mxu0 %v482
    %v1430 = vpop.f32.mrb[0].mxu0
    %v1431 = vadd.f32 %v474, %v1430
    %v1432 = vpop.f32.mrb[0].mxu0
    %v1433 = vadd.f32 %v474, %v1432
    %1434 = vmatprep.mubr.f32.mxu0 0.0
    %1435 = vmatmul.mubr.f32.gmra.mrb[0].mxu0 %v485
    %v1436 = vpop.f32.mrb[0].mxu0
    %v1437 = vadd.f32 %v479, %v1436
    %v1438 = vpop.f32.mrb[0].mxu0
    %v1439 = vadd.f32 %v479, %v1438
    %1440 = vdwg.mxu0
    %v1441 = vmax.f32 %v1354, 0.0
    %v1442 = vmax.f32 %v1356, 0.0
    %v1443 = vmax.f32 %v1431, 0.0
    %v1444 = vmax.f32 %v1433, 0.0
    %v1445 = vmax.f32 %v1360, 0.0
    %v1446 = vmax.f32 %v1362, 0.0
    %v1447 = vmax.f32 %v1437, 0.0
    %v1448 = vmax.f32 %v1439, 0.0
    %1449 = vmatprep.subr.mxu0 %v1442
    %1450 = vmatpush1.msra.mxu0 %v1441
    %1451 = vmatprep.subr.mxu0 %v1446
    %1452 = vmatpush1.msra.mxu0 %v1445
    %1453 = vmatprep.subr.mxu0 0.0
    %1454 = vmatpush1.msra.mxu0 0.0
    %1455 = vmatprep.subr.mxu0 0.0
    %1456 = vmatpush1.msra.mxu0 0.0
    %1457 = vmatprep.subr.mxu0 0.0
    %1458 = vmatpush1.msra.mxu0 0.0
    %1459 = vmatprep.subr.mxu0 0.0
    %1460 = vmatpush1.msra.mxu0 0.0
    %1461 = vmatprep.subr.mxu0 0.0
    %1462 = vmatpush1.msra.mxu0 0.0
    %1463 = vmatprep.subr.mxu0 0.0
    %1464 = vmatpush1.msra.mxu0 0.0
    %1465 = vmatprep.subr.mxu0 0.0
    %1466 = vmatpush1.msra.mxu0 0.0
    %1467 = vmatprep.subr.mxu0 0.0
    %1468 = vmatpush1.msra.mxu0 0.0
    %1469 = vmatprep.subr.mxu0 0.0
    %1470 = vmatpush1.msra.mxu0 0.0
    %1471 = vmatprep.subr.mxu0 0.0
    %1472 = vmatpush1.msra.mxu0 0.0
    %1473 = vmatprep.subr.mxu0 0.0
    %1474 = vmatpush1.msra.mxu0 0.0
    %1475 = vmatprep.subr.mxu0 0.0
    %1476 = vmatpush1.msra.mxu0 0.0
    %1477 = vmatprep.subr.mxu0 0.0
    %1478 = vmatpush1.msra.mxu0 0.0
    %1479 = vmatprep.subr.mxu0 0.0
    %1480 = vmatpush1.msra.mxu0 0.0
    %1481 = vmatprep.subr.mxu0 0.0
    %1482 = vmatpush1.msra.mxu0 0.0
    %1483 = vmatprep.subr.mxu0 0.0
    %1484 = vmatpush1.msra.mxu0 0.0
    %1485 = vmatprep.subr.mxu0 0.0
    %1486 = vmatpush1.msra.mxu0 0.0
    %1487 = vmatprep.subr.mxu0 0.0
    %1488 = vmatpush1.msra.mxu0 0.0
    %1489 = vmatprep.subr.mxu0 0.0
    %1490 = vmatpush1.msra.mxu0 0.0
    %1491 = vmatprep.subr.mxu0 0.0
    %1492 = vmatpush1.msra.mxu0 0.0
    %1493 = vmatprep.subr.mxu0 0.0
    %1494 = vmatpush1.msra.mxu0 0.0
    %1495 = vmatprep.subr.mxu0 0.0
    %1496 = vmatpush1.msra.mxu0 0.0
    %1497 = vmatprep.subr.mxu0 0.0
    %1498 = vmatpush1.msra.mxu0 0.0
    %1499 = vmatprep.subr.mxu0 0.0
    %1500 = vmatpush1.msra.mxu0 0.0
    %1501 = vmatprep.subr.mxu0 0.0
    %1502 = vmatpush1.msra.mxu0 0.0
    %1503 = vmatprep.subr.mxu0 0.0
    %1504 = vmatpush1.msra.mxu0 0.0
    %1505 = vmatprep.subr.mxu0 0.0
    %1506 = vmatpush1.msra.mxu0 0.0
    %1507 = vmatprep.subr.mxu0 0.0
    %1508 = vmatpush1.msra.mxu0 0.0
    %1509 = vmatprep.subr.mxu0 0.0
    %1510 = vmatpush1.msra.mxu0 0.0
    %1511 = vmatprep.subr.mxu0 0.0
    %1512 = vmatpush1.msra.mxu0 0.0
    %1513 = vmatprep.mubr.f32.mxu0 0.0
    %1514 = vmatmul.mubr.f32.gmra.mrb[0].mxu0 %v660
    %v1515 = vpop.f32.mrb[0].mxu0
    %v1516 = vadd.f32 %v652, %v1515
    %v1517 = vpop.f32.mrb[0].mxu0
    %v1518 = vadd.f32 %v652, %v1517
    %1519 = vmatprep.mubr.f32.mxu0 0.0
    %1520 = vmatmul.mubr.f32.gmra.mrb[0].mxu0 %v663
    %v1521 = vpop.f32.mrb[0].mxu0
    %v1522 = vadd.f32 %v657, %v1521
    %v1523 = vpop.f32.mrb[0].mxu0
    %v1524 = vadd.f32 %v657, %v1523
    %1525 = vdwg.mxu0
    %1526 = vmatprep.subr.mxu0 %v1444
    %1527 = vmatpush1.msra.mxu0 %v1443
    %1528 = vmatprep.subr.mxu0 %v1448
    %1529 = vmatpush1.msra.mxu0 %v1447
    %1530 = vmatprep.subr.mxu0 0.0
    %1531 = vmatpush1.msra.mxu0 0.0
    %1532 = vmatprep.subr.mxu0 0.0
    %1533 = vmatpush1.msra.mxu0 0.0
    %1534 = vmatprep.subr.mxu0 0.0
    %1535 = vmatpush1.msra.mxu0 0.0
    %1536 = vmatprep.subr.mxu0 0.0
    %1537 = vmatpush1.msra.mxu0 0.0
    %1538 = vmatprep.subr.mxu0 0.0
    %1539 = vmatpush1.msra.mxu0 0.0
    %1540 = vmatprep.subr.mxu0 0.0
    %1541 = vmatpush1.msra.mxu0 0.0
    %1542 = vmatprep.subr.mxu0 0.0
    %1543 = vmatpush1.msra.mxu0 0.0
    %1544 = vmatprep.subr.mxu0 0.0
    %1545 = vmatpush1.msra.mxu0 0.0
    %1546 = vmatprep.subr.mxu0 0.0
    %1547 = vmatpush1.msra.mxu0 0.0
    %1548 = vmatprep.subr.mxu0 0.0
    %1549 = vmatpush1.msra.mxu0 0.0
    %1550 = vmatprep.subr.mxu0 0.0
    %1551 = vmatpush1.msra.mxu0 0.0
    %1552 = vmatprep.subr.mxu0 0.0
    %1553 = vmatpush1.msra.mxu0 0.0
    %1554 = vmatprep.subr.mxu0 0.0
    %1555 = vmatpush1.msra.mxu0 0.0
    %1556 = vmatprep.subr.mxu0 0.0
    %1557 = vmatpush1.msra.mxu0 0.0
    %1558 = vmatprep.subr.mxu0 0.0
    %1559 = vmatpush1.msra.mxu0 0.0
    %1560 = vmatprep.subr.mxu0 0.0
    %1561 = vmatpush1.msra.mxu0 0.0
    %1562 = vmatprep.subr.mxu0 0.0
    %1563 = vmatpush1.msra.mxu0 0.0
    %1564 = vmatprep.subr.mxu0 0.0
    %1565 = vmatpush1.msra.mxu0 0.0
    %1566 = vmatprep.subr.mxu0 0.0
    %1567 = vmatpush1.msra.mxu0 0.0
    %1568 = vmatprep.subr.mxu0 0.0
    %1569 = vmatpush1.msra.mxu0 0.0
    %1570 = vmatprep.subr.mxu0 0.0
    %1571 = vmatpush1.msra.mxu0 0.0
    %1572 = vmatprep.subr.mxu0 0.0
    %1573 = vmatpush1.msra.mxu0 0.0
    %1574 = vmatprep.subr.mxu0 0.0
    %1575 = vmatpush1.msra.mxu0 0.0
    %1576 = vmatprep.subr.mxu0 0.0
    %1577 = vmatpush1.msra.mxu0 0.0
    %1578 = vmatprep.subr.mxu0 0.0
    %1579 = vmatpush1.msra.mxu0 0.0
    %1580 = vmatprep.subr.mxu0 0.0
    %1581 = vmatpush1.msra.mxu0 0.0
    %1582 = vmatprep.subr.mxu0 0.0
    %1583 = vmatpush1.msra.mxu0 0.0
    %1584 = vmatprep.subr.mxu0 0.0
    %1585 = vmatpush1.msra.mxu0 0.0
    %1586 = vmatprep.subr.mxu0 0.0
    %1587 = vmatpush1.msra.mxu0 0.0
    %1588 = vmatprep.subr.mxu0 0.0
    %1589 = vmatpush1.msra.mxu0 0.0
    %1590 = vmatprep.mubr.f32.mxu0 0.0
    %1591 = vmatmul.mubr.f32.gmra.mrb[0].mxu0 %v660
    %v1592 = vpop.f32.mrb[0].mxu0
    %v1593 = vadd.f32 %v652, %v1592
    %v1594 = vpop.f32.mrb[0].mxu0
    %v1595 = vadd.f32 %v652, %v1594
    %1596 = vmatprep.mubr.f32.mxu0 0.0
    %1597 = vmatmul.mubr.f32.gmra.mrb[0].mxu0 %v663
    %v1598 = vpop.f32.mrb[0].mxu0
    %v1599 = vadd.f32 %v657, %v1598
    %v1600 = vpop.f32.mrb[0].mxu0
    %v1601 = vadd.f32 %v657, %v1600
    %1602 = vdwg.mxu0
    %v1603 = vmax.f32 %v1516, 0.0
    %v1604 = vmax.f32 %v1518, 0.0
    %v1605 = vmax.f32 %v1593, 0.0
    %v1606 = vmax.f32 %v1595, 0.0
    %v1607 = vmax.f32 %v1522, 0.0
    %v1608 = vmax.f32 %v1524, 0.0
    %v1609 = vmax.f32 %v1599, 0.0
    %v1610 = vmax.f32 %v1601, 0.0
    %v1611 = vmul.f32 %v830, %v1603
    %v1612 = vmul.f32 %v830, %v1604
    %v1613 = vmul.f32 %v830, %v1605
    %v1614 = vmul.f32 %v830, %v1606
    %v1615 = vmul.f32 %v835, %v1607
    %v1616 = vmul.f32 %v835, %v1608
    %v1617 = vmul.f32 %v835, %v1609
    %v1618 = vmul.f32 %v835, %v1610
    %v1619 = vadd.f32 %v1611, %v1615
    %v1620 = vrot.slane %v1619, 4
    %v1621 = vadd.f32 %v1619, %v1620
    %v1622 = vrot.slane %v1621, 2
    %v1623 = vadd.f32 %v1621, %v1622
    %v1624 = vrot.slane %v1623, 1
    %v1625 = vadd.f32 %v1623, %v1624
    %v1626 = vadd.f32 %v1612, %v1616
    %v1627 = vrot.slane %v1626, 4
    %v1628 = vadd.f32 %v1626, %v1627
    %v1629 = vrot.slane %v1628, 2
    %v1630 = vadd.f32 %v1628, %v1629
    %v1631 = vrot.slane %v1630, 1
    %v1632 = vadd.f32 %v1630, %v1631
    %v1633 = vadd.f32 %v1613, %v1617
    %v1634 = vrot.slane %v1633, 4
    %v1635 = vadd.f32 %v1633, %v1634
    %v1636 = vrot.slane %v1635, 2
    %v1637 = vadd.f32 %v1635, %v1636
    %v1638 = vrot.slane %v1637, 1
    %v1639 = vadd.f32 %v1637, %v1638
    %v1640 = vadd.f32 %v1614, %v1618
    %v1641 = vrot.slane %v1640, 4
    %v1642 = vadd.f32 %v1640, %v1641
    %v1643 = vrot.slane %v1642, 2
    %v1644 = vadd.f32 %v1642, %v1643
    %v1645 = vrot.slane %v1644, 1
    %v1646 = vadd.f32 %v1644, %v1645
    %v1647 = vadd.f32 %v1625, %v876
    %v1648 = vadd.f32 %v1632, %v876
    %v1649 = vadd.f32 %v1639, %v876
    %v1650 = vadd.f32 %v1646, %v876
    %v1655 = vcombine.low %v1647, %v1648
    %v1656 = vcombine.low %v1649, %v1650
    %v1658 = vunpack.c.l.s4 1966171168
    %v1659 = vunpack.c.0.s8 %v1658
    %v1660 = vlaneseq
    %v1661 = vshrl.u32 %v1660, 7
    %v1662 = vsub.s32 %v1659, %v1661
    %v1663 = vrot.slane %v1655, %v1662
    %v1665 = vunpack.c.l.s4 1966171168
    %v1666 = vunpack.c.0.s8 %v1665
    %v1667 = vlaneseq
    %v1668 = vshrl.u32 %v1667, 7
    %v1669 = vsub.s32 %v1666, %v1668
    %v1670 = vrot.slane %v1656, %v1669
    %v1671 = vcombine.low %v1663, %v1670
    %v1673 = vunpack.c.l.s4 1966171168
    %v1674 = vunpack.c.0.s8 %v1673
    %v1675 = vlaneseq
    %v1676 = vshrl.u32 %v1675, 7
    %v1677 = vsub.s32 %v1674, %v1676
    %v1678 = vrot.slane %v1671, %v1677
    %s1680 = scalar_lea.vmem [#allocation2], 1
    %1681 = vst.msk [vmem:[%s1680] ss:$2 sm:$0xf] %vm914, %v1678
    // Predicated region
    $region14: #{tpu_custom_call.1} parent=1 // pred_check
      _
    $region15: #{tpu_custom_call.1} parent=1 // pred_check_branch
      %1683 = sbr.rel (0) target = $region17
    $region16: #{tpu_custom_call.1} parent=1 // pred_region
      %s1685 = ssub.s32 128, 128
      %1686 = vsyncadd [#allocation3], %s1685
      %s1688 = sshll.u32 [#allocation2], 4
      %s1689 = int_to_ptr.vmem [resolvable:$true] %s1688
      %1691 = dma.vmem_to_hbm [thread:$0]  %s1689, 128, %s3, [#allocation3]
    $region17: #{tpu_custom_call.1} parent=1 // pred_fallthru
      _
    // Predicated region
    $region18: #{tpu_custom_call.1} parent=1 // pred_check
      _
    $region19: #{tpu_custom_call.1} parent=1 // pred_check_branch
      %1693 = sbr.rel (0) target = $region21
    $region20: #{tpu_custom_call.1} parent=1 // pred_region
      %1694 = dma.done [#allocation3], 128
    $region21: #{tpu_custom_call.1} parent=1 // pred_fallthru
      _
    %1695 = vsyncpa [#allocation3], 1

</llo_original>
